<compile_context>
chip_gen: v5e
topology: v5e:2x2
jax: 0.10.0
libtpu: 0.0.40
codegen_flags: <defaults>
</compile_context>

<pallas_src>
import functools

import jax
import jax.numpy as jnp
import numpy as np
from jax.experimental import pallas as pl
from jax.experimental.pallas import tpu as pltpu


def _layer_norm_channels(x, w, b, eps):
    """Channel LayerNorm on a (C, H*W) tile (mean/var over the sublane axis)."""
    mu = jnp.mean(x, axis=0, keepdims=True)            # (1, HW)
    xc = x - mu
    var = jnp.mean(xc * xc, axis=0, keepdims=True)     # (1, HW)
    return xc * jax.lax.rsqrt(var + eps) * w + b       # w, b: (C, 1)


def _nafblock_kernel(x_ref, dwmask_ref,
                     ln1w_ref, ln1b_ref, w1_ref, b1_ref, w2_ref, b2_ref,
                     wsca_ref, bsca_ref, w3_ref, b3_ref, beta_ref,
                     ln2w_ref, ln2b_ref, w4_ref, b4_ref, w5_ref, b5_ref,
                     gamma_ref, o_ref, *, H, W, eps):
    C = x_ref.shape[1]
    HW = H * W

    inp = x_ref[0]                                      # (C, HW)

    # ---- branch 1: LN -> conv1(1x1) -> dwconv3x3 -> SimpleGate -> SCA -> conv3
    xn = _layer_norm_channels(inp, ln1w_ref[...], ln1b_ref[...], eps)

    # conv1: lane-dense matmul, output (2C, HW).
    y1 = jnp.dot(w1_ref[...], xn, preferred_element_type=jnp.float32) + b1_ref[...]

    # conv2: depthwise 3x3, padding=1.  Each tap is a lane-roll of the flat
    # (2C, H*W) map (XLU slot) times a per-channel weight; the zero padding is
    # applied with host-precomputed border masks (no padded VMEM scratch,
    # no zero-fill pass, no misaligned sublane windows).
    w2 = w2_ref[...]                                    # (2C, 9)
    acc = jnp.zeros_like(y1)
    for kh in range(3):
        for kw in range(3):
            k = kh * 3 + kw
            dh, dw = kh - 1, kw - 1
            off = dh * W + dw                           # flat spatial offset
            if off == 0:
                t = y1
            else:
                # t[:, s] = y1[:, (s + off) % HW]; wrapped entries are masked.
                t = pltpu.roll(y1, shift=(-off) % HW, axis=1)
                t = t * dwmask_ref[pl.ds(k, 1), :]      # zero out-of-image taps
            acc = acc + t * w2[:, k:k + 1]              # per-channel tap weight
    y2 = acc + b2_ref[...]                              # (2C, HW)

    # SimpleGate
    g = y2[:C, :] * y2[C:, :]                           # (C, HW)

    # SCA: by linearity W_sca @ mean_s(g) == mean_s(W_sca @ g), so keep the
    # matmul lane-dense (free dim = HW) and do the cross-lane mean afterwards.
    sca = jnp.mean(jnp.dot(wsca_ref[...], g, preferred_element_type=jnp.float32),
                   axis=1, keepdims=True) + bsca_ref[...]   # (C, 1)
    g = g * sca

    # conv3 (1x1)
    y3 = jnp.dot(w3_ref[...], g, preferred_element_type=jnp.float32) + b3_ref[...]

    y = inp + y3 * beta_ref[...]                        # first residual

    # ---- branch 2: LN -> conv4(1x1) -> SimpleGate -> conv5(1x1)
    z = _layer_norm_channels(y, ln2w_ref[...], ln2b_ref[...], eps)
    z = jnp.dot(w4_ref[...], z, preferred_element_type=jnp.float32) + b4_ref[...]
    z = z[:C, :] * z[C:, :]
    z = jnp.dot(w5_ref[...], z, preferred_element_type=jnp.float32) + b5_ref[...]

    o_ref[0] = y + z * gamma_ref[...]                   # second residual


def selfatt_op_forward(x_nchw, params, eps=1e-6):
    """SelfAttOp forward (the body of NAFBlock) as one fused Pallas kernel."""
    N, C, H, W = x_nchw.shape
    HW = H * W
    C2 = 2 * C

    # Free reshape (no transpose): (N, C, H, W) -> (N, C, H*W).
    x_flat = x_nchw.reshape(N, C, HW).astype(jnp.float32)

    # Border masks for the nine 3x3 taps (implements zero padding exactly).
    rows = np.arange(HW) // W
    cols = np.arange(HW) % W
    dwmask = np.ones((9, HW), np.float32)
    for kh in range(3):
        for kw in range(3):
            dh, dw = kh - 1, kw - 1
            ok = np.ones(HW, bool)
            if dh == -1:
                ok &= rows >= 1
            if dh == 1:
                ok &= rows <= H - 2
            if dw == -1:
                ok &= cols >= 1
            if dw == 1:
                ok &= cols <= W - 2
            dwmask[kh * 3 + kw] = ok.astype(np.float32)
    dwmask = jnp.asarray(dwmask)

    def m2(w):    # (O, I, 1, 1) -> (O, I)
        return w.reshape(w.shape[0], w.shape[1]).astype(jnp.float32)

    def col(v):   # (K,) or (1, K, 1, 1) -> (K, 1)
        return v.reshape(-1, 1).astype(jnp.float32)

    p_list = [
        col(params["ln1_w"]), col(params["ln1_b"]),
        m2(params["w1"]), col(params["b1"]),
        params["w2"].reshape(C2, 9).astype(jnp.float32), col(params["b2"]),
        m2(params["wsca"]), col(params["bsca"]),
        m2(params["w3"]), col(params["b3"]),
        col(params["beta"]),
        col(params["ln2_w"]), col(params["ln2_b"]),
        m2(params["w4"]), col(params["b4"]),
        m2(params["w5"]), col(params["b5"]),
        col(params["gamma"]),
    ]
    param_specs = [pl.BlockSpec(a.shape, lambda n: (0, 0)) for a in p_list]

    matmul_flops = 2 * HW * (C * C2 * 2 + C * C * 3)   # conv1, conv4, conv3, conv5, sca
    dw_flops = 3 * 9 * HW * C2
    misc_flops = 30 * HW * C
    cost = pl.CostEstimate(
        flops=int(N * (matmul_flops + dw_flops + misc_flops)),
        transcendentals=int(2 * N * HW),
        bytes_accessed=int(4 * (2 * x_flat.size + dwmask.size
                                + sum(a.size for a in p_list))),
    )

    out = pl.pallas_call(
        functools.partial(_nafblock_kernel, H=H, W=W, eps=eps),
        out_shape=jax.ShapeDtypeStruct((N, C, HW), jnp.float32),
        grid=(N,),
        in_specs=[
            pl.BlockSpec((1, C, HW), lambda n: (n, 0, 0)),
            pl.BlockSpec((9, HW), lambda n: (0, 0)),
            *param_specs,
        ],
        out_specs=pl.BlockSpec((1, C, HW), lambda n: (n, 0, 0)),
        compiler_params=pltpu.CompilerParams(
            dimension_semantics=("parallel",)),
        cost_estimate=cost,
    )(x_flat, dwmask, *p_list)

    return out.reshape(N, C, H, W)


def nafblock_forward(block_inputs, params):
    """NAFBlock.forward: takes (x, _) and applies SelfAttOp to x."""
    x, _ = block_inputs
    return selfatt_op_forward(x, params)


def _reference_forward(x, params, eps=1e-6):
    """Pure-JAX reference matching the PyTorch SelfAttOp / NAFBlock (NCHW)."""
    C = x.shape[1]

    def ln(v, w, b):
        mu = jnp.mean(v, axis=1, keepdims=True)
        var = jnp.mean((v - mu) ** 2, axis=1, keepdims=True)
        y = (v - mu) / jnp.sqrt(var + eps)
        return w.reshape(1, -1, 1, 1) * y + b.reshape(1, -1, 1, 1)

    def conv1x1(v, w, b):
        y = jax.lax.conv_general_dilated(
            v, w, (1, 1), "VALID",
            dimension_numbers=("NCHW", "OIHW", "NCHW"))
        return y + b.reshape(1, -1, 1, 1)

    def dwconv3x3(v, w, b):
        y = jax.lax.conv_general_dilated(
            v, w, (1, 1), ((1, 1), (1, 1)),
            feature_group_count=v.shape[1],
            dimension_numbers=("NCHW", "OIHW", "NCHW"))
        return y + b.reshape(1, -1, 1, 1)

    def sg(v):
        a, b2 = jnp.split(v, 2, axis=1)
        return a * b2

    t = ln(x, params["ln1_w"], params["ln1_b"])
    t = conv1x1(t, params["w1"], params["b1"])
    t = dwconv3x3(t, params["w2"], params["b2"])
    t = sg(t)
    pooled = jnp.mean(t, axis=(2, 3), keepdims=True)
    sca = conv1x1(pooled, params["wsca"], params["bsca"])
    t = t * sca
    t = conv1x1(t, params["w3"], params["b3"])
    y = x + t * params["beta"].reshape(1, C, 1, 1)
    z = conv1x1(ln(y, params["ln2_w"], params["ln2_b"]),
                params["w4"], params["b4"])
    z = sg(z)
    z = conv1x1(z, params["w5"], params["b5"])
    return y + z * params["gamma"].reshape(1, C, 1, 1)


if __name__ == "__main__":
    N, C, H, W = 2, 4, 16, 16
    C2 = 2 * C

    key = jax.random.PRNGKey(0)
    ks = jax.random.split(key, 20)
    r = lambda k, shape, s=0.1: jax.random.normal(k, shape, jnp.float32) * s

    params = {
        "ln1_w": 1.0 + r(ks[0], (C,)),
        "ln1_b": r(ks[1], (C,)),
        "w1": r(ks[2], (C2, C, 1, 1)),
        "b1": r(ks[3], (C2,)),
        "w2": r(ks[4], (C2, 1, 3, 3)),
        "b2": r(ks[5], (C2,)),
        "wsca": r(ks[6], (C, C, 1, 1)),
        "bsca": r(ks[7], (C,)),
        "w3": r(ks[8], (C, C, 1, 1)),
        "b3": r(ks[9], (C,)),
        "beta": r(ks[10], (1, C, 1, 1)),
        "ln2_w": 1.0 + r(ks[11], (C,)),
        "ln2_b": r(ks[12], (C,)),
        "w4": r(ks[13], (C2, C, 1, 1)),
        "b4": r(ks[14], (C2,)),
        "w5": r(ks[15], (C, C, 1, 1)),
        "b5": r(ks[16], (C,)),
        "gamma": r(ks[17], (1, C, 1, 1)),
    }
    x = jax.random.normal(ks[18], (N, C, H, W), jnp.float32)

    out = jax.block_until_ready(nafblock_forward((x, None), params))
    ref = jax.block_until_ready(_reference_forward(x, params))

    assert out.shape == (N, C, H, W)
    max_err = float(jnp.max(jnp.abs(out - ref)))
    assert jnp.allclose(out, ref, rtol=1e-4, atol=1e-4), (
        f"mismatch vs reference, max abs err = {max_err}")

    print("KERNEL_OK")
</pallas_src>

<mosaic_0001>
module attributes {stable_mosaic.version = 11 : i64} {
  func.func @_nafblock_kernel(%arg0: i32, %arg1: memref<1x4x256xf32, #tpu.memory_space<vmem>>, %arg2: memref<9x256xf32, #tpu.memory_space<vmem>>, %arg3: memref<4x1xf32, #tpu.memory_space<vmem>>, %arg4: memref<4x1xf32, #tpu.memory_space<vmem>>, %arg5: memref<8x4xf32, #tpu.memory_space<vmem>>, %arg6: memref<8x1xf32, #tpu.memory_space<vmem>>, %arg7: memref<8x9xf32, #tpu.memory_space<vmem>>, %arg8: memref<8x1xf32, #tpu.memory_space<vmem>>, %arg9: memref<4x4xf32, #tpu.memory_space<vmem>>, %arg10: memref<4x1xf32, #tpu.memory_space<vmem>>, %arg11: memref<4x4xf32, #tpu.memory_space<vmem>>, %arg12: memref<4x1xf32, #tpu.memory_space<vmem>>, %arg13: memref<4x1xf32, #tpu.memory_space<vmem>>, %arg14: memref<4x1xf32, #tpu.memory_space<vmem>>, %arg15: memref<4x1xf32, #tpu.memory_space<vmem>>, %arg16: memref<8x4xf32, #tpu.memory_space<vmem>>, %arg17: memref<8x1xf32, #tpu.memory_space<vmem>>, %arg18: memref<4x4xf32, #tpu.memory_space<vmem>>, %arg19: memref<4x1xf32, #tpu.memory_space<vmem>>, %arg20: memref<4x1xf32, #tpu.memory_space<vmem>>, %arg21: memref<1x4x256xf32, #tpu.memory_space<vmem>>) attributes {dimension_semantics = [#tpu.dimension_semantics<parallel>], iteration_bounds = array<i64: 2>, scalar_prefetch = 0 : i64, scratch_operands = 0 : i64, tpu.core_type = #tpu.core_type<tc>, window_params = [{transform_indices = @transform_0, window_bounds = array<i64: 1, 4, 256>}, {pipeline_mode = #tpu.pipeline_mode<synchronous>, transform_indices = @transform_1, window_bounds = array<i64: 9, 256>}, {pipeline_mode = #tpu.pipeline_mode<synchronous>, transform_indices = @transform_2, window_bounds = array<i64: 4, 1>}, {pipeline_mode = #tpu.pipeline_mode<synchronous>, transform_indices = @transform_3, window_bounds = array<i64: 4, 1>}, {pipeline_mode = #tpu.pipeline_mode<synchronous>, transform_indices = @transform_4, window_bounds = array<i64: 8, 4>}, {pipeline_mode = #tpu.pipeline_mode<synchronous>, transform_indices = @transform_5, window_bounds = array<i64: 8, 1>}, {pipeline_mode = #tpu.pipeline_mode<synchronous>, transform_indices = @transform_6, window_bounds = array<i64: 8, 9>}, {pipeline_mode = #tpu.pipeline_mode<synchronous>, transform_indices = @transform_7, window_bounds = array<i64: 8, 1>}, {pipeline_mode = #tpu.pipeline_mode<synchronous>, transform_indices = @transform_8, window_bounds = array<i64: 4, 4>}, {pipeline_mode = #tpu.pipeline_mode<synchronous>, transform_indices = @transform_9, window_bounds = array<i64: 4, 1>}, {pipeline_mode = #tpu.pipeline_mode<synchronous>, transform_indices = @transform_10, window_bounds = array<i64: 4, 4>}, {pipeline_mode = #tpu.pipeline_mode<synchronous>, transform_indices = @transform_11, window_bounds = array<i64: 4, 1>}, {pipeline_mode = #tpu.pipeline_mode<synchronous>, transform_indices = @transform_12, window_bounds = array<i64: 4, 1>}, {pipeline_mode = #tpu.pipeline_mode<synchronous>, transform_indices = @transform_13, window_bounds = array<i64: 4, 1>}, {pipeline_mode = #tpu.pipeline_mode<synchronous>, transform_indices = @transform_14, window_bounds = array<i64: 4, 1>}, {pipeline_mode = #tpu.pipeline_mode<synchronous>, transform_indices = @transform_15, window_bounds = array<i64: 8, 4>}, {pipeline_mode = #tpu.pipeline_mode<synchronous>, transform_indices = @transform_16, window_bounds = array<i64: 8, 1>}, {pipeline_mode = #tpu.pipeline_mode<synchronous>, transform_indices = @transform_17, window_bounds = array<i64: 4, 4>}, {pipeline_mode = #tpu.pipeline_mode<synchronous>, transform_indices = @transform_18, window_bounds = array<i64: 4, 1>}, {pipeline_mode = #tpu.pipeline_mode<synchronous>, transform_indices = @transform_19, window_bounds = array<i64: 4, 1>}, {transform_indices = @transform_20, window_bounds = array<i64: 1, 4, 256>}]} {
    %c0 = arith.constant 0 : index
    %c0_0 = arith.constant 0 : index
    %c0_1 = arith.constant 0 : index
    %0 = vector.load %arg1[%c0, %c0_0, %c0_1] : memref<1x4x256xf32, #tpu.memory_space<vmem>>, vector<1x4x256xf32>
    %1 = vector.shape_cast %0 : vector<1x4x256xf32> to vector<4x256xf32>
    %c0_2 = arith.constant 0 : index
    %c0_3 = arith.constant 0 : index
    %2 = vector.load %arg3[%c0_2, %c0_3] : memref<4x1xf32, #tpu.memory_space<vmem>>, vector<4x1xf32>
    %c0_4 = arith.constant 0 : index
    %c0_5 = arith.constant 0 : index
    %3 = vector.load %arg4[%c0_4, %c0_5] : memref<4x1xf32, #tpu.memory_space<vmem>>, vector<4x1xf32>
    %cst = arith.constant dense<0.000000e+00> : vector<256xf32>
    %4 = vector.multi_reduction <add>, %1, %cst [0] : vector<4x256xf32> to vector<256xf32>
    %5 = vector.shape_cast %4 : vector<256xf32> to vector<1x256xf32>
    %cst_6 = arith.constant 4.000000e+00 : f32
    %6 = vector.broadcast %cst_6 : f32 to vector<1x256xf32>
    %7 = arith.divf %5, %6 : vector<1x256xf32>
    %8 = vector.broadcast %7 : vector<1x256xf32> to vector<4x256xf32>
    %9 = arith.subf %1, %8 : vector<4x256xf32>
    %10 = arith.mulf %9, %9 : vector<4x256xf32>
    %cst_7 = arith.constant dense<0.000000e+00> : vector<256xf32>
    %11 = vector.multi_reduction <add>, %10, %cst_7 [0] : vector<4x256xf32> to vector<256xf32>
    %12 = vector.shape_cast %11 : vector<256xf32> to vector<1x256xf32>
    %cst_8 = arith.constant 4.000000e+00 : f32
    %13 = vector.broadcast %cst_8 : f32 to vector<1x256xf32>
    %14 = arith.divf %12, %13 : vector<1x256xf32>
    %cst_9 = arith.constant 9.99999997E-7 : f32
    %15 = vector.broadcast %cst_9 : f32 to vector<1x256xf32>
    %16 = arith.addf %14, %15 : vector<1x256xf32>
    %17 = math.rsqrt %16 : vector<1x256xf32>
    %18 = vector.broadcast %17 : vector<1x256xf32> to vector<4x256xf32>
    %19 = arith.mulf %9, %18 : vector<4x256xf32>
    %20 = vector.broadcast %2 : vector<4x1xf32> to vector<4x256xf32>
    %21 = arith.mulf %19, %20 : vector<4x256xf32>
    %22 = vector.broadcast %3 : vector<4x1xf32> to vector<4x256xf32>
    %23 = arith.addf %21, %22 : vector<4x256xf32>
    %c0_10 = arith.constant 0 : index
    %c0_11 = arith.constant 0 : index
    %24 = vector.load %arg5[%c0_10, %c0_11] : memref<8x4xf32, #tpu.memory_space<vmem>>, vector<8x4xf32>
    %cst_12 = arith.constant dense<0.000000e+00> : vector<8x256xf32>
    %25 = tpu.matmul %24, %23, %cst_12 {dimension_numbers = #tpu.dot_dimension_numbers<[1], [0], [0], [1], [0, 0, 1, 1], [], []>} : vector<8x4xf32>, vector<4x256xf32>, vector<8x256xf32> -> vector<8x256xf32>
    %c0_13 = arith.constant 0 : index
    %c0_14 = arith.constant 0 : index
    %26 = vector.load %arg6[%c0_13, %c0_14] : memref<8x1xf32, #tpu.memory_space<vmem>>, vector<8x1xf32>
    %27 = vector.broadcast %26 : vector<8x1xf32> to vector<8x256xf32>
    %28 = arith.addf %25, %27 : vector<8x256xf32>
    %c0_15 = arith.constant 0 : index
    %c0_16 = arith.constant 0 : index
    %29 = vector.load %arg7[%c0_15, %c0_16] : memref<8x9xf32, #tpu.memory_space<vmem>>, vector<8x9xf32>
    %cst_17 = arith.constant 0.000000e+00 : f32
    %30 = vector.broadcast %cst_17 : f32 to vector<8x256xf32>
    %c17_i32 = arith.constant 17 : i32
    %31 = tpu.dynamic_rotate %28 by %c17_i32 dim 1 : vector<8x256xf32>, i32 -> vector<8x256xf32>
    %c0_18 = arith.constant 0 : index
    %c0_19 = arith.constant 0 : index
    %32 = vector.load %arg2[%c0_18, %c0_19] : memref<9x256xf32, #tpu.memory_space<vmem>>, vector<1x256xf32>
    %33 = vector.broadcast %32 : vector<1x256xf32> to vector<8x256xf32>
    %34 = arith.mulf %31, %33 : vector<8x256xf32>
    %35 = vector.extract_strided_slice %29 {offsets = [0, 0], sizes = [8, 1], strides = [1, 1]} : vector<8x9xf32> to vector<8x1xf32>
    %36 = vector.broadcast %35 : vector<8x1xf32> to vector<8x256xf32>
    %37 = arith.mulf %34, %36 : vector<8x256xf32>
    %38 = arith.addf %30, %37 : vector<8x256xf32>
    %c16_i32 = arith.constant 16 : i32
    %39 = tpu.dynamic_rotate %28 by %c16_i32 dim 1 : vector<8x256xf32>, i32 -> vector<8x256xf32>
    %c1 = arith.constant 1 : index
    %c0_20 = arith.constant 0 : index
    %40 = vector.load %arg2[%c1, %c0_20] : memref<9x256xf32, #tpu.memory_space<vmem>>, vector<1x256xf32>
    %41 = vector.broadcast %40 : vector<1x256xf32> to vector<8x256xf32>
    %42 = arith.mulf %39, %41 : vector<8x256xf32>
    %43 = vector.extract_strided_slice %29 {offsets = [0, 1], sizes = [8, 1], strides = [1, 1]} : vector<8x9xf32> to vector<8x1xf32>
    %44 = vector.broadcast %43 : vector<8x1xf32> to vector<8x256xf32>
    %45 = arith.mulf %42, %44 : vector<8x256xf32>
    %46 = arith.addf %38, %45 : vector<8x256xf32>
    %c15_i32 = arith.constant 15 : i32
    %47 = tpu.dynamic_rotate %28 by %c15_i32 dim 1 : vector<8x256xf32>, i32 -> vector<8x256xf32>
    %c2 = arith.constant 2 : index
    %c0_21 = arith.constant 0 : index
    %48 = vector.load %arg2[%c2, %c0_21] : memref<9x256xf32, #tpu.memory_space<vmem>>, vector<1x256xf32>
    %49 = vector.broadcast %48 : vector<1x256xf32> to vector<8x256xf32>
    %50 = arith.mulf %47, %49 : vector<8x256xf32>
    %51 = vector.extract_strided_slice %29 {offsets = [0, 2], sizes = [8, 1], strides = [1, 1]} : vector<8x9xf32> to vector<8x1xf32>
    %52 = vector.broadcast %51 : vector<8x1xf32> to vector<8x256xf32>
    %53 = arith.mulf %50, %52 : vector<8x256xf32>
    %54 = arith.addf %46, %53 : vector<8x256xf32>
    %c1_i32 = arith.constant 1 : i32
    %55 = tpu.dynamic_rotate %28 by %c1_i32 dim 1 : vector<8x256xf32>, i32 -> vector<8x256xf32>
    %c3 = arith.constant 3 : index
    %c0_22 = arith.constant 0 : index
    %56 = vector.load %arg2[%c3, %c0_22] : memref<9x256xf32, #tpu.memory_space<vmem>>, vector<1x256xf32>
    %57 = vector.broadcast %56 : vector<1x256xf32> to vector<8x256xf32>
    %58 = arith.mulf %55, %57 : vector<8x256xf32>
    %59 = vector.extract_strided_slice %29 {offsets = [0, 3], sizes = [8, 1], strides = [1, 1]} : vector<8x9xf32> to vector<8x1xf32>
    %60 = vector.broadcast %59 : vector<8x1xf32> to vector<8x256xf32>
    %61 = arith.mulf %58, %60 : vector<8x256xf32>
    %62 = arith.addf %54, %61 : vector<8x256xf32>
    %63 = vector.extract_strided_slice %29 {offsets = [0, 4], sizes = [8, 1], strides = [1, 1]} : vector<8x9xf32> to vector<8x1xf32>
    %64 = vector.broadcast %63 : vector<8x1xf32> to vector<8x256xf32>
    %65 = arith.mulf %28, %64 : vector<8x256xf32>
    %66 = arith.addf %62, %65 : vector<8x256xf32>
    %c255_i32 = arith.constant 255 : i32
    %67 = tpu.dynamic_rotate %28 by %c255_i32 dim 1 : vector<8x256xf32>, i32 -> vector<8x256xf32>
    %c5 = arith.constant 5 : index
    %c0_23 = arith.constant 0 : index
    %68 = vector.load %arg2[%c5, %c0_23] : memref<9x256xf32, #tpu.memory_space<vmem>>, vector<1x256xf32>
    %69 = vector.broadcast %68 : vector<1x256xf32> to vector<8x256xf32>
    %70 = arith.mulf %67, %69 : vector<8x256xf32>
    %71 = vector.extract_strided_slice %29 {offsets = [0, 5], sizes = [8, 1], strides = [1, 1]} : vector<8x9xf32> to vector<8x1xf32>
    %72 = vector.broadcast %71 : vector<8x1xf32> to vector<8x256xf32>
    %73 = arith.mulf %70, %72 : vector<8x256xf32>
    %74 = arith.addf %66, %73 : vector<8x256xf32>
    %c241_i32 = arith.constant 241 : i32
    %75 = tpu.dynamic_rotate %28 by %c241_i32 dim 1 : vector<8x256xf32>, i32 -> vector<8x256xf32>
    %c6 = arith.constant 6 : index
    %c0_24 = arith.constant 0 : index
    %76 = vector.load %arg2[%c6, %c0_24] : memref<9x256xf32, #tpu.memory_space<vmem>>, vector<1x256xf32>
    %77 = vector.broadcast %76 : vector<1x256xf32> to vector<8x256xf32>
    %78 = arith.mulf %75, %77 : vector<8x256xf32>
    %79 = vector.extract_strided_slice %29 {offsets = [0, 6], sizes = [8, 1], strides = [1, 1]} : vector<8x9xf32> to vector<8x1xf32>
    %80 = vector.broadcast %79 : vector<8x1xf32> to vector<8x256xf32>
    %81 = arith.mulf %78, %80 : vector<8x256xf32>
    %82 = arith.addf %74, %81 : vector<8x256xf32>
    %c240_i32 = arith.constant 240 : i32
    %83 = tpu.dynamic_rotate %28 by %c240_i32 dim 1 : vector<8x256xf32>, i32 -> vector<8x256xf32>
    %c7 = arith.constant 7 : index
    %c0_25 = arith.constant 0 : index
    %84 = vector.load %arg2[%c7, %c0_25] : memref<9x256xf32, #tpu.memory_space<vmem>>, vector<1x256xf32>
    %85 = vector.broadcast %84 : vector<1x256xf32> to vector<8x256xf32>
    %86 = arith.mulf %83, %85 : vector<8x256xf32>
    %87 = vector.extract_strided_slice %29 {offsets = [0, 7], sizes = [8, 1], strides = [1, 1]} : vector<8x9xf32> to vector<8x1xf32>
    %88 = vector.broadcast %87 : vector<8x1xf32> to vector<8x256xf32>
    %89 = arith.mulf %86, %88 : vector<8x256xf32>
    %90 = arith.addf %82, %89 : vector<8x256xf32>
    %c239_i32 = arith.constant 239 : i32
    %91 = tpu.dynamic_rotate %28 by %c239_i32 dim 1 : vector<8x256xf32>, i32 -> vector<8x256xf32>
    %c8 = arith.constant 8 : index
    %c0_26 = arith.constant 0 : index
    %92 = vector.load %arg2[%c8, %c0_26] : memref<9x256xf32, #tpu.memory_space<vmem>>, vector<1x256xf32>
    %93 = vector.broadcast %92 : vector<1x256xf32> to vector<8x256xf32>
    %94 = arith.mulf %91, %93 : vector<8x256xf32>
    %95 = vector.extract_strided_slice %29 {offsets = [0, 8], sizes = [8, 1], strides = [1, 1]} : vector<8x9xf32> to vector<8x1xf32>
    %96 = vector.broadcast %95 : vector<8x1xf32> to vector<8x256xf32>
    %97 = arith.mulf %94, %96 : vector<8x256xf32>
    %98 = arith.addf %90, %97 : vector<8x256xf32>
    %c0_27 = arith.constant 0 : index
    %c0_28 = arith.constant 0 : index
    %99 = vector.load %arg8[%c0_27, %c0_28] : memref<8x1xf32, #tpu.memory_space<vmem>>, vector<8x1xf32>
    %100 = vector.broadcast %99 : vector<8x1xf32> to vector<8x256xf32>
    %101 = arith.addf %98, %100 : vector<8x256xf32>
    %102 = vector.extract_strided_slice %101 {offsets = [0, 0], sizes = [4, 256], strides = [1, 1]} : vector<8x256xf32> to vector<4x256xf32>
    %103 = vector.extract_strided_slice %101 {offsets = [4, 0], sizes = [4, 256], strides = [1, 1]} : vector<8x256xf32> to vector<4x256xf32>
    %104 = arith.mulf %102, %103 : vector<4x256xf32>
    %c0_29 = arith.constant 0 : index
    %c0_30 = arith.constant 0 : index
    %105 = vector.load %arg9[%c0_29, %c0_30] : memref<4x4xf32, #tpu.memory_space<vmem>>, vector<4x4xf32>
    %cst_31 = arith.constant dense<0.000000e+00> : vector<4x256xf32>
    %106 = tpu.matmul %105, %104, %cst_31 {dimension_numbers = #tpu.dot_dimension_numbers<[1], [0], [0], [1], [0, 0, 1, 1], [], []>} : vector<4x4xf32>, vector<4x256xf32>, vector<4x256xf32> -> vector<4x256xf32>
    %cst_32 = arith.constant dense<0.000000e+00> : vector<4xf32>
    %107 = vector.multi_reduction <add>, %106, %cst_32 [1] : vector<4x256xf32> to vector<4xf32>
    %108 = vector.shape_cast %107 : vector<4xf32> to vector<4x1xf32>
    %cst_33 = arith.constant 2.560000e+02 : f32
    %109 = vector.broadcast %cst_33 : f32 to vector<4x1xf32>
    %110 = arith.divf %108, %109 : vector<4x1xf32>
    %c0_34 = arith.constant 0 : index
    %c0_35 = arith.constant 0 : index
    %111 = vector.load %arg10[%c0_34, %c0_35] : memref<4x1xf32, #tpu.memory_space<vmem>>, vector<4x1xf32>
    %112 = arith.addf %110, %111 : vector<4x1xf32>
    %113 = vector.broadcast %112 : vector<4x1xf32> to vector<4x256xf32>
    %114 = arith.mulf %104, %113 : vector<4x256xf32>
    %c0_36 = arith.constant 0 : index
    %c0_37 = arith.constant 0 : index
    %115 = vector.load %arg11[%c0_36, %c0_37] : memref<4x4xf32, #tpu.memory_space<vmem>>, vector<4x4xf32>
    %cst_38 = arith.constant dense<0.000000e+00> : vector<4x256xf32>
    %116 = tpu.matmul %115, %114, %cst_38 {dimension_numbers = #tpu.dot_dimension_numbers<[1], [0], [0], [1], [0, 0, 1, 1], [], []>} : vector<4x4xf32>, vector<4x256xf32>, vector<4x256xf32> -> vector<4x256xf32>
    %c0_39 = arith.constant 0 : index
    %c0_40 = arith.constant 0 : index
    %117 = vector.load %arg12[%c0_39, %c0_40] : memref<4x1xf32, #tpu.memory_space<vmem>>, vector<4x1xf32>
    %118 = vector.broadcast %117 : vector<4x1xf32> to vector<4x256xf32>
    %119 = arith.addf %116, %118 : vector<4x256xf32>
    %c0_41 = arith.constant 0 : index
    %c0_42 = arith.constant 0 : index
    %120 = vector.load %arg13[%c0_41, %c0_42] : memref<4x1xf32, #tpu.memory_space<vmem>>, vector<4x1xf32>
    %121 = vector.broadcast %120 : vector<4x1xf32> to vector<4x256xf32>
    %122 = arith.mulf %119, %121 : vector<4x256xf32>
    %123 = arith.addf %1, %122 : vector<4x256xf32>
    %c0_43 = arith.constant 0 : index
    %c0_44 = arith.constant 0 : index
    %124 = vector.load %arg14[%c0_43, %c0_44] : memref<4x1xf32, #tpu.memory_space<vmem>>, vector<4x1xf32>
    %c0_45 = arith.constant 0 : index
    %c0_46 = arith.constant 0 : index
    %125 = vector.load %arg15[%c0_45, %c0_46] : memref<4x1xf32, #tpu.memory_space<vmem>>, vector<4x1xf32>
    %cst_47 = arith.constant dense<0.000000e+00> : vector<256xf32>
    %126 = vector.multi_reduction <add>, %123, %cst_47 [0] : vector<4x256xf32> to vector<256xf32>
    %127 = vector.shape_cast %126 : vector<256xf32> to vector<1x256xf32>
    %cst_48 = arith.constant 4.000000e+00 : f32
    %128 = vector.broadcast %cst_48 : f32 to vector<1x256xf32>
    %129 = arith.divf %127, %128 : vector<1x256xf32>
    %130 = vector.broadcast %129 : vector<1x256xf32> to vector<4x256xf32>
    %131 = arith.subf %123, %130 : vector<4x256xf32>
    %132 = arith.mulf %131, %131 : vector<4x256xf32>
    %cst_49 = arith.constant dense<0.000000e+00> : vector<256xf32>
    %133 = vector.multi_reduction <add>, %132, %cst_49 [0] : vector<4x256xf32> to vector<256xf32>
    %134 = vector.shape_cast %133 : vector<256xf32> to vector<1x256xf32>
    %cst_50 = arith.constant 4.000000e+00 : f32
    %135 = vector.broadcast %cst_50 : f32 to vector<1x256xf32>
    %136 = arith.divf %134, %135 : vector<1x256xf32>
    %cst_51 = arith.constant 9.99999997E-7 : f32
    %137 = vector.broadcast %cst_51 : f32 to vector<1x256xf32>
    %138 = arith.addf %136, %137 : vector<1x256xf32>
    %139 = math.rsqrt %138 : vector<1x256xf32>
    %140 = vector.broadcast %139 : vector<1x256xf32> to vector<4x256xf32>
    %141 = arith.mulf %131, %140 : vector<4x256xf32>
    %142 = vector.broadcast %124 : vector<4x1xf32> to vector<4x256xf32>
    %143 = arith.mulf %141, %142 : vector<4x256xf32>
    %144 = vector.broadcast %125 : vector<4x1xf32> to vector<4x256xf32>
    %145 = arith.addf %143, %144 : vector<4x256xf32>
    %c0_52 = arith.constant 0 : index
    %c0_53 = arith.constant 0 : index
    %146 = vector.load %arg16[%c0_52, %c0_53] : memref<8x4xf32, #tpu.memory_space<vmem>>, vector<8x4xf32>
    %cst_54 = arith.constant dense<0.000000e+00> : vector<8x256xf32>
    %147 = tpu.matmul %146, %145, %cst_54 {dimension_numbers = #tpu.dot_dimension_numbers<[1], [0], [0], [1], [0, 0, 1, 1], [], []>} : vector<8x4xf32>, vector<4x256xf32>, vector<8x256xf32> -> vector<8x256xf32>
    %c0_55 = arith.constant 0 : index
    %c0_56 = arith.constant 0 : index
    %148 = vector.load %arg17[%c0_55, %c0_56] : memref<8x1xf32, #tpu.memory_space<vmem>>, vector<8x1xf32>
    %149 = vector.broadcast %148 : vector<8x1xf32> to vector<8x256xf32>
    %150 = arith.addf %147, %149 : vector<8x256xf32>
    %151 = vector.extract_strided_slice %150 {offsets = [0, 0], sizes = [4, 256], strides = [1, 1]} : vector<8x256xf32> to vector<4x256xf32>
    %152 = vector.extract_strided_slice %150 {offsets = [4, 0], sizes = [4, 256], strides = [1, 1]} : vector<8x256xf32> to vector<4x256xf32>
    %153 = arith.mulf %151, %152 : vector<4x256xf32>
    %c0_57 = arith.constant 0 : index
    %c0_58 = arith.constant 0 : index
    %154 = vector.load %arg18[%c0_57, %c0_58] : memref<4x4xf32, #tpu.memory_space<vmem>>, vector<4x4xf32>
    %cst_59 = arith.constant dense<0.000000e+00> : vector<4x256xf32>
    %155 = tpu.matmul %154, %153, %cst_59 {dimension_numbers = #tpu.dot_dimension_numbers<[1], [0], [0], [1], [0, 0, 1, 1], [], []>} : vector<4x4xf32>, vector<4x256xf32>, vector<4x256xf32> -> vector<4x256xf32>
    %c0_60 = arith.constant 0 : index
    %c0_61 = arith.constant 0 : index
    %156 = vector.load %arg19[%c0_60, %c0_61] : memref<4x1xf32, #tpu.memory_space<vmem>>, vector<4x1xf32>
    %157 = vector.broadcast %156 : vector<4x1xf32> to vector<4x256xf32>
    %158 = arith.addf %155, %157 : vector<4x256xf32>
    %c0_62 = arith.constant 0 : index
    %c0_63 = arith.constant 0 : index
    %159 = vector.load %arg20[%c0_62, %c0_63] : memref<4x1xf32, #tpu.memory_space<vmem>>, vector<4x1xf32>
    %160 = vector.broadcast %159 : vector<4x1xf32> to vector<4x256xf32>
    %161 = arith.mulf %158, %160 : vector<4x256xf32>
    %162 = arith.addf %123, %161 : vector<4x256xf32>
    %c0_64 = arith.constant 0 : index
    %c0_65 = arith.constant 0 : index
    %c0_66 = arith.constant 0 : index
    %163 = vector.load %arg21[%c0_64, %c0_65, %c0_66] : memref<1x4x256xf32, #tpu.memory_space<vmem>>, vector<1x4x256xf32>
    %164 = vector.shape_cast %163 : vector<1x4x256xf32> to vector<4x256xf32>
    %165 = vector.shape_cast %162 : vector<4x256xf32> to vector<1x4x256xf32>
    tpu.vector_store %arg21[%c0_64, %c0_65, %c0_66], %165 {strides = array<i32>} : memref<1x4x256xf32, #tpu.memory_space<vmem>>, vector<1x4x256xf32>,
    return
  }
  func.func @transform_0(%arg0: i32) -> (i32, i32, i32) {
    %c0_i32 = arith.constant 0 : i32
    %c0_i32_0 = arith.constant 0 : i32
    %c0_i32_1 = arith.constant 0 : i32
    return %arg0, %c0_i32, %c0_i32_0 : i32, i32, i32
  }
  func.func @transform_1(%arg0: i32) -> (i32, i32) {
    %c0_i32 = arith.constant 0 : i32
    %c0_i32_0 = arith.constant 0 : i32
    %c0_i32_1 = arith.constant 0 : i32
    return %c0_i32, %c0_i32_0 : i32, i32
  }
  func.func @transform_2(%arg0: i32) -> (i32, i32) {
    %c0_i32 = arith.constant 0 : i32
    %c0_i32_0 = arith.constant 0 : i32
    %c0_i32_1 = arith.constant 0 : i32
    return %c0_i32, %c0_i32_0 : i32, i32
  }
  func.func @transform_3(%arg0: i32) -> (i32, i32) {
    %c0_i32 = arith.constant 0 : i32
    %c0_i32_0 = arith.constant 0 : i32
    %c0_i32_1 = arith.constant 0 : i32
    return %c0_i32, %c0_i32_0 : i32, i32
  }
  func.func @transform_4(%arg0: i32) -> (i32, i32) {
    %c0_i32 = arith.constant 0 : i32
    %c0_i32_0 = arith.constant 0 : i32
    %c0_i32_1 = arith.constant 0 : i32
    return %c0_i32, %c0_i32_0 : i32, i32
  }
  func.func @transform_5(%arg0: i32) -> (i32, i32) {
    %c0_i32 = arith.constant 0 : i32
    %c0_i32_0 = arith.constant 0 : i32
    %c0_i32_1 = arith.constant 0 : i32
    return %c0_i32, %c0_i32_0 : i32, i32
  }
  func.func @transform_6(%arg0: i32) -> (i32, i32) {
    %c0_i32 = arith.constant 0 : i32
    %c0_i32_0 = arith.constant 0 : i32
    %c0_i32_1 = arith.constant 0 : i32
    return %c0_i32, %c0_i32_0 : i32, i32
  }
  func.func @transform_7(%arg0: i32) -> (i32, i32) {
    %c0_i32 = arith.constant 0 : i32
    %c0_i32_0 = arith.constant 0 : i32
    %c0_i32_1 = arith.constant 0 : i32
    return %c0_i32, %c0_i32_0 : i32, i32
  }
  func.func @transform_8(%arg0: i32) -> (i32, i32) {
    %c0_i32 = arith.constant 0 : i32
    %c0_i32_0 = arith.constant 0 : i32
    %c0_i32_1 = arith.constant 0 : i32
    return %c0_i32, %c0_i32_0 : i32, i32
  }
  func.func @transform_9(%arg0: i32) -> (i32, i32) {
    %c0_i32 = arith.constant 0 : i32
    %c0_i32_0 = arith.constant 0 : i32
    %c0_i32_1 = arith.constant 0 : i32
    return %c0_i32, %c0_i32_0 : i32, i32
  }
  func.func @transform_10(%arg0: i32) -> (i32, i32) {
    %c0_i32 = arith.constant 0 : i32
    %c0_i32_0 = arith.constant 0 : i32
    %c0_i32_1 = arith.constant 0 : i32
    return %c0_i32, %c0_i32_0 : i32, i32
  }
  func.func @transform_11(%arg0: i32) -> (i32, i32) {
    %c0_i32 = arith.constant 0 : i32
    %c0_i32_0 = arith.constant 0 : i32
    %c0_i32_1 = arith.constant 0 : i32
    return %c0_i32, %c0_i32_0 : i32, i32
  }
  func.func @transform_12(%arg0: i32) -> (i32, i32) {
    %c0_i32 = arith.constant 0 : i32
    %c0_i32_0 = arith.constant 0 : i32
    %c0_i32_1 = arith.constant 0 : i32
    return %c0_i32, %c0_i32_0 : i32, i32
  }
  func.func @transform_13(%arg0: i32) -> (i32, i32) {
    %c0_i32 = arith.constant 0 : i32
    %c0_i32_0 = arith.constant 0 : i32
    %c0_i32_1 = arith.constant 0 : i32
    return %c0_i32, %c0_i32_0 : i32, i32
  }
  func.func @transform_14(%arg0: i32) -> (i32, i32) {
    %c0_i32 = arith.constant 0 : i32
    %c0_i32_0 = arith.constant 0 : i32
    %c0_i32_1 = arith.constant 0 : i32
    return %c0_i32, %c0_i32_0 : i32, i32
  }
  func.func @transform_15(%arg0: i32) -> (i32, i32) {
    %c0_i32 = arith.constant 0 : i32
    %c0_i32_0 = arith.constant 0 : i32
    %c0_i32_1 = arith.constant 0 : i32
    return %c0_i32, %c0_i32_0 : i32, i32
  }
  func.func @transform_16(%arg0: i32) -> (i32, i32) {
    %c0_i32 = arith.constant 0 : i32
    %c0_i32_0 = arith.constant 0 : i32
    %c0_i32_1 = arith.constant 0 : i32
    return %c0_i32, %c0_i32_0 : i32, i32
  }
  func.func @transform_17(%arg0: i32) -> (i32, i32) {
    %c0_i32 = arith.constant 0 : i32
    %c0_i32_0 = arith.constant 0 : i32
    %c0_i32_1 = arith.constant 0 : i32
    return %c0_i32, %c0_i32_0 : i32, i32
  }
  func.func @transform_18(%arg0: i32) -> (i32, i32) {
    %c0_i32 = arith.constant 0 : i32
    %c0_i32_0 = arith.constant 0 : i32
    %c0_i32_1 = arith.constant 0 : i32
    return %c0_i32, %c0_i32_0 : i32, i32
  }
  func.func @transform_19(%arg0: i32) -> (i32, i32) {
    %c0_i32 = arith.constant 0 : i32
    %c0_i32_0 = arith.constant 0 : i32
    %c0_i32_1 = arith.constant 0 : i32
    return %c0_i32, %c0_i32_0 : i32, i32
  }
  func.func @transform_20(%arg0: i32) -> (i32, i32, i32) {
    %c0_i32 = arith.constant 0 : i32
    %c0_i32_0 = arith.constant 0 : i32
    %c0_i32_1 = arith.constant 0 : i32
    return %arg0, %c0_i32, %c0_i32_0 : i32, i32, i32
  }
}

</mosaic_0001>

<llo_original>
// kernel: tpu_custom_call.1
$region0: #{tpu_custom_call.1}
  #allocation0 [shape = 'u32[]', space=smem, size = 0x4, offset = 0x4, fixed_abs, tag = 'smem constant byte address 0x4 - core index']
  #allocation1 [shape = 'u32[72,128]{1,0:T(1,128)}', space=vmem, size = 0x9000, scoped, tag = 'internal scratch']
  %s0 = inlined_call_operand.vmem [shape: f32[2,4,256], index: 0, kind: input, shape index: {}]
  %s1 = inlined_call_operand.vmem [shape: f32[9,256], index: 1, kind: input, shape index: {}]
  %s2 = inlined_call_operand.vmem [shape: f32[4,1], index: 2, kind: input, shape index: {}]
  %s3 = inlined_call_operand.vmem [shape: f32[4,1], index: 3, kind: input, shape index: {}]
  %s4 = inlined_call_operand.vmem [shape: f32[8,4], index: 4, kind: input, shape index: {}]
  %s5 = inlined_call_operand.vmem [shape: f32[8,1], index: 5, kind: input, shape index: {}]
  %s6 = inlined_call_operand.vmem [shape: f32[8,9], index: 6, kind: input, shape index: {}]
  %s7 = inlined_call_operand.vmem [shape: f32[8,1], index: 7, kind: input, shape index: {}]
  %s8 = inlined_call_operand.vmem [shape: f32[4,4], index: 8, kind: input, shape index: {}]
  %s9 = inlined_call_operand.vmem [shape: f32[4,1], index: 9, kind: input, shape index: {}]
  %s10 = inlined_call_operand.vmem [shape: f32[4,4], index: 10, kind: input, shape index: {}]
  %s11 = inlined_call_operand.vmem [shape: f32[4,1], index: 11, kind: input, shape index: {}]
  %s12 = inlined_call_operand.vmem [shape: f32[4,1], index: 12, kind: input, shape index: {}]
  %s13 = inlined_call_operand.vmem [shape: f32[4,1], index: 13, kind: input, shape index: {}]
  %s14 = inlined_call_operand.vmem [shape: f32[4,1], index: 14, kind: input, shape index: {}]
  %s15 = inlined_call_operand.vmem [shape: f32[8,4], index: 15, kind: input, shape index: {}]
  %s16 = inlined_call_operand.vmem [shape: f32[8,1], index: 16, kind: input, shape index: {}]
  %s17 = inlined_call_operand.vmem [shape: f32[4,4], index: 17, kind: input, shape index: {}]
  %s18 = inlined_call_operand.vmem [shape: f32[4,1], index: 18, kind: input, shape index: {}]
  %s19 = inlined_call_operand.vmem [shape: f32[4,1], index: 19, kind: input, shape index: {}]
  %s20 = inlined_call_operand.hbm [shape: f32[2,4,256], index: 20, kind: output, shape index: {}]
  %s21 = sld [smem:[#allocation0]]
  $region113: #{tpu_custom_call.1} parent=0
    _
  %s23 = ssub.s32 1, %s21
  %s24 = scalar_select 0, %s23, %s21
  $region1: #{tpu_custom_call.1} parent=0
    #allocation2 [shape = 'u8[8192]{0}', space=vmem, size = 0x2000, scoped, tag = 'output window, operand 0']
    #allocation3 [shape = 's32[2]{0}', space=sflag, size = 0x8, scoped, tag = 'scoped memory for tpu_custom_call.1']
    %25 = vsyncpa [#allocation3], 0
    %s26 = scalar_lea.sflag [#allocation3], 1
    %27 = vsyncpa %s26, 0
    loop: start=0, step=1, limit=4
    $region2: #{tpu_custom_call.1} parent=1 // loop_pre_header
      _
    $region3: #{tpu_custom_call.1} parent=1 // loop_header
      %s29 = sphi 0, %s33
      %p30 = scmp.ge.s32.totalorder %s29, 4
      %s39 = sphi 0, %s41
      %s42 = sphi 0, %s39
      %s43 = sphi 0, %s42
      %s59 = sphi 0, %s43
      %s63 = sphi 0, %s63
      %s65 = sphi 0, %s63
      %s66 = sphi 0, %s65
      %s80 = sphi 0, %s66
      %s84 = sphi 0, %s84
      %s86 = sphi 0, %s84
      %s87 = sphi 0, %s86
      %s101 = sphi 0, %s87
      %s105 = sphi 0, %s105
      %s107 = sphi 0, %s105
      %s108 = sphi 0, %s107
      %s122 = sphi 0, %s108
      %s126 = sphi 0, %s126
      %s128 = sphi 0, %s126
      %s129 = sphi 0, %s128
      %s143 = sphi 0, %s129
      %s147 = sphi 0, %s147
      %s149 = sphi 0, %s147
      %s150 = sphi 0, %s149
      %s164 = sphi 0, %s150
      %s168 = sphi 0, %s168
      %s170 = sphi 0, %s168
      %s171 = sphi 0, %s170
      %s185 = sphi 0, %s171
      %s189 = sphi 0, %s189
      %s191 = sphi 0, %s189
      %s192 = sphi 0, %s191
      %s206 = sphi 0, %s192
      %s210 = sphi 0, %s210
      %s212 = sphi 0, %s210
      %s213 = sphi 0, %s212
      %s227 = sphi 0, %s213
      %s231 = sphi 0, %s231
      %s233 = sphi 0, %s231
      %s234 = sphi 0, %s233
      %s248 = sphi 0, %s234
      %s252 = sphi 0, %s252
      %s254 = sphi 0, %s252
      %s255 = sphi 0, %s254
      %s269 = sphi 0, %s255
      %s273 = sphi 0, %s273
      %s275 = sphi 0, %s273
      %s276 = sphi 0, %s275
      %s290 = sphi 0, %s276
      %s294 = sphi 0, %s294
      %s296 = sphi 0, %s294
      %s297 = sphi 0, %s296
      %s311 = sphi 0, %s297
      %s315 = sphi 0, %s315
      %s317 = sphi 0, %s315
      %s318 = sphi 0, %s317
      %s332 = sphi 0, %s318
      %s336 = sphi 0, %s336
      %s338 = sphi 0, %s336
      %s339 = sphi 0, %s338
      %s353 = sphi 0, %s339
      %s357 = sphi 0, %s357
      %s359 = sphi 0, %s357
      %s360 = sphi 0, %s359
      %s374 = sphi 0, %s360
      %s378 = sphi 0, %s378
      %s380 = sphi 0, %s378
      %s381 = sphi 0, %s380
      %s395 = sphi 0, %s381
      %s399 = sphi 0, %s399
      %s401 = sphi 0, %s399
      %s402 = sphi 0, %s401
      %s416 = sphi 0, %s402
      %s420 = sphi 0, %s420
      %s422 = sphi 0, %s420
      %s423 = sphi 0, %s422
      %s437 = sphi 0, %s423
      %s441 = sphi 0, %s441
      %s443 = sphi 0, %s441
      %s444 = sphi 0, %s443
      %s458 = sphi 0, %s444
      %s464 = sphi 0, %s466
      %s467 = sphi 0, %s464
      %s468 = sphi 0, %s467
      %s484 = sphi 0, %s468
    $region4: #{tpu_custom_call.1} parent=1 // loop_header_branch
      %32 = sbr.rel (%p30) target = $region8
    $region5: #{tpu_custom_call.1} parent=1 // loop_body
      %s34 = ssub.s32 %s29, 1
      %s35 = ssub.s32 %s29, 2
      %s36 = sadd.s32 %s29, 1
      %s37 = ssub.s32 %s29, %s36
      %p38 = scmp.eq.s32.totalorder %s37, 0
      %s40 = sadd.s32 %s39, 1
      %s41 = scalar_select %p38, %s39, %s40
      %p44 = pneg %p38
      %p45 = scmp.eq.s32.totalorder %s29, 1
      %p46 = por %p44, %p45
      %p47 = scmp.ne.s32.totalorder %s39, %s42
      %p48 = scmp.eq.s32.totalorder %s29, 0
      %p49 = por %p47, %p48
      %p50 = scmp.ne.s32.totalorder %s39, %s42
      %p51 = scmp.eq.s32.totalorder %s34, 1
      %p52 = por %p50, %p51
      %p53 = scmp.ne.s32.totalorder %s42, %s43
      %p54 = scmp.eq.s32.totalorder %s34, 0
      %p55 = por %p53, %p54
      %p56 = scmp.ne.s32.totalorder %s42, %s43
      %p57 = scmp.eq.s32.totalorder %s35, 1
      %p58 = por %p56, %p57
      %p60 = scmp.ne.s32.totalorder %s43, %s59
      %p61 = scmp.eq.s32.totalorder %s35, 0
      %p62 = por %p60, %p61
      %s64 = sadd.s32 %s63, 1
      %p67 = scmp.eq.s32.totalorder %s29, 1
      %p68 = scmp.ne.s32.totalorder %s63, %s65
      %p69 = scmp.eq.s32.totalorder %s29, 0
      %p70 = por %p68, %p69
      %p71 = scmp.ne.s32.totalorder %s63, %s65
      %p72 = scmp.eq.s32.totalorder %s34, 1
      %p73 = por %p71, %p72
      %p74 = scmp.ne.s32.totalorder %s65, %s66
      %p75 = scmp.eq.s32.totalorder %s34, 0
      %p76 = por %p74, %p75
      %p77 = scmp.ne.s32.totalorder %s65, %s66
      %p78 = scmp.eq.s32.totalorder %s35, 1
      %p79 = por %p77, %p78
      %p81 = scmp.ne.s32.totalorder %s66, %s80
      %p82 = scmp.eq.s32.totalorder %s35, 0
      %p83 = por %p81, %p82
      %s85 = sadd.s32 %s84, 1
      %p88 = scmp.eq.s32.totalorder %s29, 1
      %p89 = scmp.ne.s32.totalorder %s84, %s86
      %p90 = scmp.eq.s32.totalorder %s29, 0
      %p91 = por %p89, %p90
      %p92 = scmp.ne.s32.totalorder %s84, %s86
      %p93 = scmp.eq.s32.totalorder %s34, 1
      %p94 = por %p92, %p93
      %p95 = scmp.ne.s32.totalorder %s86, %s87
      %p96 = scmp.eq.s32.totalorder %s34, 0
      %p97 = por %p95, %p96
      %p98 = scmp.ne.s32.totalorder %s86, %s87
      %p99 = scmp.eq.s32.totalorder %s35, 1
      %p100 = por %p98, %p99
      %p102 = scmp.ne.s32.totalorder %s87, %s101
      %p103 = scmp.eq.s32.totalorder %s35, 0
      %p104 = por %p102, %p103
      %s106 = sadd.s32 %s105, 1
      %p109 = scmp.eq.s32.totalorder %s29, 1
      %p110 = scmp.ne.s32.totalorder %s105, %s107
      %p111 = scmp.eq.s32.totalorder %s29, 0
      %p112 = por %p110, %p111
      %p113 = scmp.ne.s32.totalorder %s105, %s107
      %p114 = scmp.eq.s32.totalorder %s34, 1
      %p115 = por %p113, %p114
      %p116 = scmp.ne.s32.totalorder %s107, %s108
      %p117 = scmp.eq.s32.totalorder %s34, 0
      %p118 = por %p116, %p117
      %p119 = scmp.ne.s32.totalorder %s107, %s108
      %p120 = scmp.eq.s32.totalorder %s35, 1
      %p121 = por %p119, %p120
      %p123 = scmp.ne.s32.totalorder %s108, %s122
      %p124 = scmp.eq.s32.totalorder %s35, 0
      %p125 = por %p123, %p124
      %s127 = sadd.s32 %s126, 1
      %p130 = scmp.eq.s32.totalorder %s29, 1
      %p131 = scmp.ne.s32.totalorder %s126, %s128
      %p132 = scmp.eq.s32.totalorder %s29, 0
      %p133 = por %p131, %p132
      %p134 = scmp.ne.s32.totalorder %s126, %s128
      %p135 = scmp.eq.s32.totalorder %s34, 1
      %p136 = por %p134, %p135
      %p137 = scmp.ne.s32.totalorder %s128, %s129
      %p138 = scmp.eq.s32.totalorder %s34, 0
      %p139 = por %p137, %p138
      %p140 = scmp.ne.s32.totalorder %s128, %s129
      %p141 = scmp.eq.s32.totalorder %s35, 1
      %p142 = por %p140, %p141
      %p144 = scmp.ne.s32.totalorder %s129, %s143
      %p145 = scmp.eq.s32.totalorder %s35, 0
      %p146 = por %p144, %p145
      %s148 = sadd.s32 %s147, 1
      %p151 = scmp.eq.s32.totalorder %s29, 1
      %p152 = scmp.ne.s32.totalorder %s147, %s149
      %p153 = scmp.eq.s32.totalorder %s29, 0
      %p154 = por %p152, %p153
      %p155 = scmp.ne.s32.totalorder %s147, %s149
      %p156 = scmp.eq.s32.totalorder %s34, 1
      %p157 = por %p155, %p156
      %p158 = scmp.ne.s32.totalorder %s149, %s150
      %p159 = scmp.eq.s32.totalorder %s34, 0
      %p160 = por %p158, %p159
      %p161 = scmp.ne.s32.totalorder %s149, %s150
      %p162 = scmp.eq.s32.totalorder %s35, 1
      %p163 = por %p161, %p162
      %p165 = scmp.ne.s32.totalorder %s150, %s164
      %p166 = scmp.eq.s32.totalorder %s35, 0
      %p167 = por %p165, %p166
      %s169 = sadd.s32 %s168, 1
      %p172 = scmp.eq.s32.totalorder %s29, 1
      %p173 = scmp.ne.s32.totalorder %s168, %s170
      %p174 = scmp.eq.s32.totalorder %s29, 0
      %p175 = por %p173, %p174
      %p176 = scmp.ne.s32.totalorder %s168, %s170
      %p177 = scmp.eq.s32.totalorder %s34, 1
      %p178 = por %p176, %p177
      %p179 = scmp.ne.s32.totalorder %s170, %s171
      %p180 = scmp.eq.s32.totalorder %s34, 0
      %p181 = por %p179, %p180
      %p182 = scmp.ne.s32.totalorder %s170, %s171
      %p183 = scmp.eq.s32.totalorder %s35, 1
      %p184 = por %p182, %p183
      %p186 = scmp.ne.s32.totalorder %s171, %s185
      %p187 = scmp.eq.s32.totalorder %s35, 0
      %p188 = por %p186, %p187
      %s190 = sadd.s32 %s189, 1
      %p193 = scmp.eq.s32.totalorder %s29, 1
      %p194 = scmp.ne.s32.totalorder %s189, %s191
      %p195 = scmp.eq.s32.totalorder %s29, 0
      %p196 = por %p194, %p195
      %p197 = scmp.ne.s32.totalorder %s189, %s191
      %p198 = scmp.eq.s32.totalorder %s34, 1
      %p199 = por %p197, %p198
      %p200 = scmp.ne.s32.totalorder %s191, %s192
      %p201 = scmp.eq.s32.totalorder %s34, 0
      %p202 = por %p200, %p201
      %p203 = scmp.ne.s32.totalorder %s191, %s192
      %p204 = scmp.eq.s32.totalorder %s35, 1
      %p205 = por %p203, %p204
      %p207 = scmp.ne.s32.totalorder %s192, %s206
      %p208 = scmp.eq.s32.totalorder %s35, 0
      %p209 = por %p207, %p208
      %s211 = sadd.s32 %s210, 1
      %p214 = scmp.eq.s32.totalorder %s29, 1
      %p215 = scmp.ne.s32.totalorder %s210, %s212
      %p216 = scmp.eq.s32.totalorder %s29, 0
      %p217 = por %p215, %p216
      %p218 = scmp.ne.s32.totalorder %s210, %s212
      %p219 = scmp.eq.s32.totalorder %s34, 1
      %p220 = por %p218, %p219
      %p221 = scmp.ne.s32.totalorder %s212, %s213
      %p222 = scmp.eq.s32.totalorder %s34, 0
      %p223 = por %p221, %p222
      %p224 = scmp.ne.s32.totalorder %s212, %s213
      %p225 = scmp.eq.s32.totalorder %s35, 1
      %p226 = por %p224, %p225
      %p228 = scmp.ne.s32.totalorder %s213, %s227
      %p229 = scmp.eq.s32.totalorder %s35, 0
      %p230 = por %p228, %p229
      %s232 = sadd.s32 %s231, 1
      %p235 = scmp.eq.s32.totalorder %s29, 1
      %p236 = scmp.ne.s32.totalorder %s231, %s233
      %p237 = scmp.eq.s32.totalorder %s29, 0
      %p238 = por %p236, %p237
      %p239 = scmp.ne.s32.totalorder %s231, %s233
      %p240 = scmp.eq.s32.totalorder %s34, 1
      %p241 = por %p239, %p240
      %p242 = scmp.ne.s32.totalorder %s233, %s234
      %p243 = scmp.eq.s32.totalorder %s34, 0
      %p244 = por %p242, %p243
      %p245 = scmp.ne.s32.totalorder %s233, %s234
      %p246 = scmp.eq.s32.totalorder %s35, 1
      %p247 = por %p245, %p246
      %p249 = scmp.ne.s32.totalorder %s234, %s248
      %p250 = scmp.eq.s32.totalorder %s35, 0
      %p251 = por %p249, %p250
      %s253 = sadd.s32 %s252, 1
      %p256 = scmp.eq.s32.totalorder %s29, 1
      %p257 = scmp.ne.s32.totalorder %s252, %s254
      %p258 = scmp.eq.s32.totalorder %s29, 0
      %p259 = por %p257, %p258
      %p260 = scmp.ne.s32.totalorder %s252, %s254
      %p261 = scmp.eq.s32.totalorder %s34, 1
      %p262 = por %p260, %p261
      %p263 = scmp.ne.s32.totalorder %s254, %s255
      %p264 = scmp.eq.s32.totalorder %s34, 0
      %p265 = por %p263, %p264
      %p266 = scmp.ne.s32.totalorder %s254, %s255
      %p267 = scmp.eq.s32.totalorder %s35, 1
      %p268 = por %p266, %p267
      %p270 = scmp.ne.s32.totalorder %s255, %s269
      %p271 = scmp.eq.s32.totalorder %s35, 0
      %p272 = por %p270, %p271
      %s274 = sadd.s32 %s273, 1
      %p277 = scmp.eq.s32.totalorder %s29, 1
      %p278 = scmp.ne.s32.totalorder %s273, %s275
      %p279 = scmp.eq.s32.totalorder %s29, 0
      %p280 = por %p278, %p279
      %p281 = scmp.ne.s32.totalorder %s273, %s275
      %p282 = scmp.eq.s32.totalorder %s34, 1
      %p283 = por %p281, %p282
      %p284 = scmp.ne.s32.totalorder %s275, %s276
      %p285 = scmp.eq.s32.totalorder %s34, 0
      %p286 = por %p284, %p285
      %p287 = scmp.ne.s32.totalorder %s275, %s276
      %p288 = scmp.eq.s32.totalorder %s35, 1
      %p289 = por %p287, %p288
      %p291 = scmp.ne.s32.totalorder %s276, %s290
      %p292 = scmp.eq.s32.totalorder %s35, 0
      %p293 = por %p291, %p292
      %s295 = sadd.s32 %s294, 1
      %p298 = scmp.eq.s32.totalorder %s29, 1
      %p299 = scmp.ne.s32.totalorder %s294, %s296
      %p300 = scmp.eq.s32.totalorder %s29, 0
      %p301 = por %p299, %p300
      %p302 = scmp.ne.s32.totalorder %s294, %s296
      %p303 = scmp.eq.s32.totalorder %s34, 1
      %p304 = por %p302, %p303
      %p305 = scmp.ne.s32.totalorder %s296, %s297
      %p306 = scmp.eq.s32.totalorder %s34, 0
      %p307 = por %p305, %p306
      %p308 = scmp.ne.s32.totalorder %s296, %s297
      %p309 = scmp.eq.s32.totalorder %s35, 1
      %p310 = por %p308, %p309
      %p312 = scmp.ne.s32.totalorder %s297, %s311
      %p313 = scmp.eq.s32.totalorder %s35, 0
      %p314 = por %p312, %p313
      %s316 = sadd.s32 %s315, 1
      %p319 = scmp.eq.s32.totalorder %s29, 1
      %p320 = scmp.ne.s32.totalorder %s315, %s317
      %p321 = scmp.eq.s32.totalorder %s29, 0
      %p322 = por %p320, %p321
      %p323 = scmp.ne.s32.totalorder %s315, %s317
      %p324 = scmp.eq.s32.totalorder %s34, 1
      %p325 = por %p323, %p324
      %p326 = scmp.ne.s32.totalorder %s317, %s318
      %p327 = scmp.eq.s32.totalorder %s34, 0
      %p328 = por %p326, %p327
      %p329 = scmp.ne.s32.totalorder %s317, %s318
      %p330 = scmp.eq.s32.totalorder %s35, 1
      %p331 = por %p329, %p330
      %p333 = scmp.ne.s32.totalorder %s318, %s332
      %p334 = scmp.eq.s32.totalorder %s35, 0
      %p335 = por %p333, %p334
      %s337 = sadd.s32 %s336, 1
      %p340 = scmp.eq.s32.totalorder %s29, 1
      %p341 = scmp.ne.s32.totalorder %s336, %s338
      %p342 = scmp.eq.s32.totalorder %s29, 0
      %p343 = por %p341, %p342
      %p344 = scmp.ne.s32.totalorder %s336, %s338
      %p345 = scmp.eq.s32.totalorder %s34, 1
      %p346 = por %p344, %p345
      %p347 = scmp.ne.s32.totalorder %s338, %s339
      %p348 = scmp.eq.s32.totalorder %s34, 0
      %p349 = por %p347, %p348
      %p350 = scmp.ne.s32.totalorder %s338, %s339
      %p351 = scmp.eq.s32.totalorder %s35, 1
      %p352 = por %p350, %p351
      %p354 = scmp.ne.s32.totalorder %s339, %s353
      %p355 = scmp.eq.s32.totalorder %s35, 0
      %p356 = por %p354, %p355
      %s358 = sadd.s32 %s357, 1
      %p361 = scmp.eq.s32.totalorder %s29, 1
      %p362 = scmp.ne.s32.totalorder %s357, %s359
      %p363 = scmp.eq.s32.totalorder %s29, 0
      %p364 = por %p362, %p363
      %p365 = scmp.ne.s32.totalorder %s357, %s359
      %p366 = scmp.eq.s32.totalorder %s34, 1
      %p367 = por %p365, %p366
      %p368 = scmp.ne.s32.totalorder %s359, %s360
      %p369 = scmp.eq.s32.totalorder %s34, 0
      %p370 = por %p368, %p369
      %p371 = scmp.ne.s32.totalorder %s359, %s360
      %p372 = scmp.eq.s32.totalorder %s35, 1
      %p373 = por %p371, %p372
      %p375 = scmp.ne.s32.totalorder %s360, %s374
      %p376 = scmp.eq.s32.totalorder %s35, 0
      %p377 = por %p375, %p376
      %s379 = sadd.s32 %s378, 1
      %p382 = scmp.eq.s32.totalorder %s29, 1
      %p383 = scmp.ne.s32.totalorder %s378, %s380
      %p384 = scmp.eq.s32.totalorder %s29, 0
      %p385 = por %p383, %p384
      %p386 = scmp.ne.s32.totalorder %s378, %s380
      %p387 = scmp.eq.s32.totalorder %s34, 1
      %p388 = por %p386, %p387
      %p389 = scmp.ne.s32.totalorder %s380, %s381
      %p390 = scmp.eq.s32.totalorder %s34, 0
      %p391 = por %p389, %p390
      %p392 = scmp.ne.s32.totalorder %s380, %s381
      %p393 = scmp.eq.s32.totalorder %s35, 1
      %p394 = por %p392, %p393
      %p396 = scmp.ne.s32.totalorder %s381, %s395
      %p397 = scmp.eq.s32.totalorder %s35, 0
      %p398 = por %p396, %p397
      %s400 = sadd.s32 %s399, 1
      %p403 = scmp.eq.s32.totalorder %s29, 1
      %p404 = scmp.ne.s32.totalorder %s399, %s401
      %p405 = scmp.eq.s32.totalorder %s29, 0
      %p406 = por %p404, %p405
      %p407 = scmp.ne.s32.totalorder %s399, %s401
      %p408 = scmp.eq.s32.totalorder %s34, 1
      %p409 = por %p407, %p408
      %p410 = scmp.ne.s32.totalorder %s401, %s402
      %p411 = scmp.eq.s32.totalorder %s34, 0
      %p412 = por %p410, %p411
      %p413 = scmp.ne.s32.totalorder %s401, %s402
      %p414 = scmp.eq.s32.totalorder %s35, 1
      %p415 = por %p413, %p414
      %p417 = scmp.ne.s32.totalorder %s402, %s416
      %p418 = scmp.eq.s32.totalorder %s35, 0
      %p419 = por %p417, %p418
      %s421 = sadd.s32 %s420, 1
      %p424 = scmp.eq.s32.totalorder %s29, 1
      %p425 = scmp.ne.s32.totalorder %s420, %s422
      %p426 = scmp.eq.s32.totalorder %s29, 0
      %p427 = por %p425, %p426
      %p428 = scmp.ne.s32.totalorder %s420, %s422
      %p429 = scmp.eq.s32.totalorder %s34, 1
      %p430 = por %p428, %p429
      %p431 = scmp.ne.s32.totalorder %s422, %s423
      %p432 = scmp.eq.s32.totalorder %s34, 0
      %p433 = por %p431, %p432
      %p434 = scmp.ne.s32.totalorder %s422, %s423
      %p435 = scmp.eq.s32.totalorder %s35, 1
      %p436 = por %p434, %p435
      %p438 = scmp.ne.s32.totalorder %s423, %s437
      %p439 = scmp.eq.s32.totalorder %s35, 0
      %p440 = por %p438, %p439
      %s442 = sadd.s32 %s441, 1
      %p445 = scmp.eq.s32.totalorder %s29, 1
      %p446 = scmp.ne.s32.totalorder %s441, %s443
      %p447 = scmp.eq.s32.totalorder %s29, 0
      %p448 = por %p446, %p447
      %p449 = scmp.ne.s32.totalorder %s441, %s443
      %p450 = scmp.eq.s32.totalorder %s34, 1
      %p451 = por %p449, %p450
      %p452 = scmp.ne.s32.totalorder %s443, %s444
      %p453 = scmp.eq.s32.totalorder %s34, 0
      %p454 = por %p452, %p453
      %p455 = scmp.ne.s32.totalorder %s443, %s444
      %p456 = scmp.eq.s32.totalorder %s35, 1
      %p457 = por %p455, %p456
      %p459 = scmp.ne.s32.totalorder %s444, %s458
      %p460 = scmp.eq.s32.totalorder %s35, 0
      %p461 = por %p459, %p460
      %s462 = ssub.s32 %s29, %s36
      %p463 = scmp.eq.s32.totalorder %s462, 0
      %s465 = sadd.s32 %s464, 1
      %s466 = scalar_select %p463, %s464, %s465
      %p469 = pneg %p463
      %p470 = scmp.eq.s32.totalorder %s29, 1
      %p471 = por %p469, %p470
      %p472 = scmp.ne.s32.totalorder %s464, %s467
      %p473 = scmp.eq.s32.totalorder %s29, 0
      %p474 = por %p472, %p473
      %p475 = scmp.ne.s32.totalorder %s464, %s467
      %p476 = scmp.eq.s32.totalorder %s34, 1
      %p477 = por %p475, %p476
      %p478 = scmp.ne.s32.totalorder %s467, %s468
      %p479 = scmp.eq.s32.totalorder %s34, 0
      %p480 = por %p478, %p479
      %p481 = scmp.ne.s32.totalorder %s467, %s468
      %p482 = scmp.eq.s32.totalorder %s35, 1
      %p483 = por %p481, %p482
      %p485 = scmp.ne.s32.totalorder %s468, %s484
      %p486 = scmp.eq.s32.totalorder %s35, 0
      %p487 = por %p485, %p486
      %p488 = scmp.le.s32.totalorder 1, %s29
      %p489 = scmp.lt.s32.totalorder %s29, 3
      %p490 = pnand %p488, %p489
      %p491 = pneg %p490
      // Predicated region
      $region9: #{tpu_custom_call.1} parent=5 // pred_check
        _
      $region10: #{tpu_custom_call.1} parent=5 // pred_check_branch
        %493 = sbr.rel (%p490) target = $region12
      $region11: #{tpu_custom_call.1} parent=5 // pred_region
        %s494 = ssub.s32 %s29, 1
        // Predicated region
        $region13: #{tpu_custom_call.1} parent=11 // pred_check
          %p495 = pneg %p76
        $region14: #{tpu_custom_call.1} parent=11 // pred_check_branch
          %497 = sbr.rel (%p495) target = $region16
        $region15: #{tpu_custom_call.1} parent=11 // pred_region
          _
        $region16: #{tpu_custom_call.1} parent=11 // pred_fallthru
          _
        // Predicated region
        $region17: #{tpu_custom_call.1} parent=11 // pred_check
          %p498 = pneg %p97
        $region18: #{tpu_custom_call.1} parent=11 // pred_check_branch
          %500 = sbr.rel (%p498) target = $region20
        $region19: #{tpu_custom_call.1} parent=11 // pred_region
          _
        $region20: #{tpu_custom_call.1} parent=11 // pred_fallthru
          _
        // Predicated region
        $region21: #{tpu_custom_call.1} parent=11 // pred_check
          %p501 = pneg %p118
        $region22: #{tpu_custom_call.1} parent=11 // pred_check_branch
          %503 = sbr.rel (%p501) target = $region24
        $region23: #{tpu_custom_call.1} parent=11 // pred_region
          _
        $region24: #{tpu_custom_call.1} parent=11 // pred_fallthru
          _
        // Predicated region
        $region25: #{tpu_custom_call.1} parent=11 // pred_check
          %p504 = pneg %p139
        $region26: #{tpu_custom_call.1} parent=11 // pred_check_branch
          %506 = sbr.rel (%p504) target = $region28
        $region27: #{tpu_custom_call.1} parent=11 // pred_region
          _
        $region28: #{tpu_custom_call.1} parent=11 // pred_fallthru
          _
        // Predicated region
        $region29: #{tpu_custom_call.1} parent=11 // pred_check
          %p507 = pneg %p160
        $region30: #{tpu_custom_call.1} parent=11 // pred_check_branch
          %509 = sbr.rel (%p507) target = $region32
        $region31: #{tpu_custom_call.1} parent=11 // pred_region
          _
        $region32: #{tpu_custom_call.1} parent=11 // pred_fallthru
          _
        // Predicated region
        $region33: #{tpu_custom_call.1} parent=11 // pred_check
          %p510 = pneg %p181
        $region34: #{tpu_custom_call.1} parent=11 // pred_check_branch
          %512 = sbr.rel (%p510) target = $region36
        $region35: #{tpu_custom_call.1} parent=11 // pred_region
          _
        $region36: #{tpu_custom_call.1} parent=11 // pred_fallthru
          _
        // Predicated region
        $region37: #{tpu_custom_call.1} parent=11 // pred_check
          %p513 = pneg %p202
        $region38: #{tpu_custom_call.1} parent=11 // pred_check_branch
          %515 = sbr.rel (%p513) target = $region40
        $region39: #{tpu_custom_call.1} parent=11 // pred_region
          _
        $region40: #{tpu_custom_call.1} parent=11 // pred_fallthru
          _
        // Predicated region
        $region41: #{tpu_custom_call.1} parent=11 // pred_check
          %p516 = pneg %p223
        $region42: #{tpu_custom_call.1} parent=11 // pred_check_branch
          %518 = sbr.rel (%p516) target = $region44
        $region43: #{tpu_custom_call.1} parent=11 // pred_region
          _
        $region44: #{tpu_custom_call.1} parent=11 // pred_fallthru
          _
        // Predicated region
        $region45: #{tpu_custom_call.1} parent=11 // pred_check
          %p519 = pneg %p244
        $region46: #{tpu_custom_call.1} parent=11 // pred_check_branch
          %521 = sbr.rel (%p519) target = $region48
        $region47: #{tpu_custom_call.1} parent=11 // pred_region
          _
        $region48: #{tpu_custom_call.1} parent=11 // pred_fallthru
          _
        // Predicated region
        $region49: #{tpu_custom_call.1} parent=11 // pred_check
          %p522 = pneg %p265
        $region50: #{tpu_custom_call.1} parent=11 // pred_check_branch
          %524 = sbr.rel (%p522) target = $region52
        $region51: #{tpu_custom_call.1} parent=11 // pred_region
          _
        $region52: #{tpu_custom_call.1} parent=11 // pred_fallthru
          _
        // Predicated region
        $region53: #{tpu_custom_call.1} parent=11 // pred_check
          %p525 = pneg %p286
        $region54: #{tpu_custom_call.1} parent=11 // pred_check_branch
          %527 = sbr.rel (%p525) target = $region56
        $region55: #{tpu_custom_call.1} parent=11 // pred_region
          _
        $region56: #{tpu_custom_call.1} parent=11 // pred_fallthru
          _
        // Predicated region
        $region57: #{tpu_custom_call.1} parent=11 // pred_check
          %p528 = pneg %p307
        $region58: #{tpu_custom_call.1} parent=11 // pred_check_branch
          %530 = sbr.rel (%p528) target = $region60
        $region59: #{tpu_custom_call.1} parent=11 // pred_region
          _
        $region60: #{tpu_custom_call.1} parent=11 // pred_fallthru
          _
        // Predicated region
        $region61: #{tpu_custom_call.1} parent=11 // pred_check
          %p531 = pneg %p328
        $region62: #{tpu_custom_call.1} parent=11 // pred_check_branch
          %533 = sbr.rel (%p531) target = $region64
        $region63: #{tpu_custom_call.1} parent=11 // pred_region
          _
        $region64: #{tpu_custom_call.1} parent=11 // pred_fallthru
          _
        // Predicated region
        $region65: #{tpu_custom_call.1} parent=11 // pred_check
          %p534 = pneg %p349
        $region66: #{tpu_custom_call.1} parent=11 // pred_check_branch
          %536 = sbr.rel (%p534) target = $region68
        $region67: #{tpu_custom_call.1} parent=11 // pred_region
          _
        $region68: #{tpu_custom_call.1} parent=11 // pred_fallthru
          _
        // Predicated region
        $region69: #{tpu_custom_call.1} parent=11 // pred_check
          %p537 = pneg %p370
        $region70: #{tpu_custom_call.1} parent=11 // pred_check_branch
          %539 = sbr.rel (%p537) target = $region72
        $region71: #{tpu_custom_call.1} parent=11 // pred_region
          _
        $region72: #{tpu_custom_call.1} parent=11 // pred_fallthru
          _
        // Predicated region
        $region73: #{tpu_custom_call.1} parent=11 // pred_check
          %p540 = pneg %p391
        $region74: #{tpu_custom_call.1} parent=11 // pred_check_branch
          %542 = sbr.rel (%p540) target = $region76
        $region75: #{tpu_custom_call.1} parent=11 // pred_region
          _
        $region76: #{tpu_custom_call.1} parent=11 // pred_fallthru
          _
        // Predicated region
        $region77: #{tpu_custom_call.1} parent=11 // pred_check
          %p543 = pneg %p412
        $region78: #{tpu_custom_call.1} parent=11 // pred_check_branch
          %545 = sbr.rel (%p543) target = $region80
        $region79: #{tpu_custom_call.1} parent=11 // pred_region
          _
        $region80: #{tpu_custom_call.1} parent=11 // pred_fallthru
          _
        // Predicated region
        $region81: #{tpu_custom_call.1} parent=11 // pred_check
          %p546 = pneg %p433
        $region82: #{tpu_custom_call.1} parent=11 // pred_check_branch
          %548 = sbr.rel (%p546) target = $region84
        $region83: #{tpu_custom_call.1} parent=11 // pred_region
          _
        $region84: #{tpu_custom_call.1} parent=11 // pred_fallthru
          _
        // Predicated region
        $region85: #{tpu_custom_call.1} parent=11 // pred_check
          %p549 = pneg %p454
        $region86: #{tpu_custom_call.1} parent=11 // pred_check_branch
          %551 = sbr.rel (%p549) target = $region88
        $region87: #{tpu_custom_call.1} parent=11 // pred_region
          _
        $region88: #{tpu_custom_call.1} parent=11 // pred_fallthru
          _
      $region12: #{tpu_custom_call.1} parent=5 // pred_fallthru
        _
      %p552 = scmp.lt.s32.totalorder %s29, 2
      // Predicated region
      $region89: #{tpu_custom_call.1} parent=5 // pred_check
        %p553 = pneg %p552
      $region90: #{tpu_custom_call.1} parent=5 // pred_check_branch
        %555 = sbr.rel (%p553) target = $region92
      $region91: #{tpu_custom_call.1} parent=5 // pred_region
        // Predicated region
        $region93: #{tpu_custom_call.1} parent=91 // pred_check
          %p556 = pneg %p49
        $region94: #{tpu_custom_call.1} parent=91 // pred_check_branch
          %558 = sbr.rel (%p556) target = $region96
        $region95: #{tpu_custom_call.1} parent=91 // pred_region
          %p559 = scmp.lt.s32.totalorder %s29, 1
          %s560 = scalar_select %p559, %s29, 1
          %s561 = smul.addr %s560, 2
          %s562 = smul.addr %s561, 4
          %s563 = scalar_lea.vmem %s0, %s562
        $region96: #{tpu_custom_call.1} parent=91 // pred_fallthru
          _
      $region92: #{tpu_custom_call.1} parent=5 // pred_fallthru
        _
      %p564 = scmp.le.s32.totalorder 1, %s29
      %p565 = scmp.lt.s32.totalorder %s29, 3
      %p566 = pnand %p564, %p565
      %p567 = pneg %p566
      // Predicated region
      $region97: #{tpu_custom_call.1} parent=5 // pred_check
        _
      $region98: #{tpu_custom_call.1} parent=5 // pred_check_branch
        %569 = sbr.rel (%p566) target = $region100
      $region99: #{tpu_custom_call.1} parent=5 // pred_region
        %s570 = ssub.s32 %s29, 1
        %p571 = scmp.lt.s32.totalorder %s34, 1
        %s572 = scalar_select %p571, %s34, 1
        %s573 = smul.addr %s572, 2
        %s574 = smul.addr %s573, 4
        %s575 = scalar_lea.vmem %s0, %s574
        %p576 = pneg %p55
        %p577 = pneg %p52
        %p578 = pneg %p76
        %p579 = pneg %p73
        %p580 = pneg %p97
        %p581 = pneg %p94
        %p582 = pneg %p118
        %p583 = pneg %p115
        %p584 = pneg %p139
        %p585 = pneg %p136
        %p586 = pneg %p160
        %p587 = pneg %p157
        %p588 = pneg %p181
        %p589 = pneg %p178
        %p590 = pneg %p202
        %p591 = pneg %p199
        %p592 = pneg %p223
        %p593 = pneg %p220
        %p594 = pneg %p244
        %p595 = pneg %p241
        %p596 = pneg %p265
        %p597 = pneg %p262
        %p598 = pneg %p286
        %p599 = pneg %p283
        %p600 = pneg %p307
        %p601 = pneg %p304
        %p602 = pneg %p328
        %p603 = pneg %p325
        %p604 = pneg %p349
        %p605 = pneg %p346
        %p606 = pneg %p370
        %p607 = pneg %p367
        %p608 = pneg %p391
        %p609 = pneg %p388
        %p610 = pneg %p412
        %p611 = pneg %p409
        %p612 = pneg %p433
        %p613 = pneg %p430
        %p614 = pneg %p454
        %p615 = pneg %p451
        %p616 = pneg %p480
        %p617 = pneg %p477
        %s618 = sand.u32 %s467, 1
        %s619 = scalar_lea.sflag [#allocation3], %s618
        %s620 = sand.u32 %s467, 1
        %s621 = smul.addr %s620, 8
        %s622 = scalar_lea.vmem [#allocation2], %s621
        %p623 = scmp.lt.s32.totalorder %s34, 1
        %s624 = scalar_select %p623, %s34, 1
        %s625 = smul.addr %s624, 2
        %s626 = smul.addr %s625, 4
        %s627 = scalar_lea.vmem %s0, %s626
        %v628 = vld [vmem:[%s627] sm:$0xff]
        %v629 = vld [vmem:[%s2] sm:$0xf]
        %v630 = vld [vmem:[%s3] sm:$0xf]
        %632 = vst [vmem:[#allocation1] ss:$2 sm:$0xff] %v628
        %v633 = vld.sshfl [vmem:[#allocation1] sm:$0xff pattern:$0x75316420]
        %v634 = vld.sshfl [vmem:[#allocation1 + $0x8] sm:$0xff pattern:$0x75316420]
        %vm637 = vcmask 1043456
        %v638 = vsel %vm637, %v633, 0.0
        %v639 = vrot.slane %v638, 4
        %v640 = vadd.f32 %v638, %v639
        %v641 = vrot.slane %v640, 2
        %v642 = vadd.f32 %v640, %v641
        %v643 = vrot.slane %v642, 1
        %v644 = vadd.f32 %v642, %v643
        %v645 = vsel %vm637, %v634, 0.0
        %v646 = vrot.slane %v645, 4
        %v647 = vadd.f32 %v645, %v646
        %v648 = vrot.slane %v647, 2
        %v649 = vadd.f32 %v647, %v648
        %v650 = vrot.slane %v649, 1
        %v651 = vadd.f32 %v649, %v650
        %v652 = vrcp.pop 4.0
        %v653 = vmul.f32 4.0, %v652
        %v654 = vsub.f32 1.0, %v653
        %v655 = vmul.f32 %v652, %v654
        %v656 = vadd.f32 %v652, %v655
        %vm657 = vweird.f32 %v652
        %v658 = vsel %vm657, %v652, %v656
        %v659 = vmul.f32 %v644, %v658
        %v660 = vmul.f32 %v651, %v658
        %v663 = vrot.slane %v660, 4
        %v664 = vsel %vm637, %v659, %v663
        %v666 = vsub.f32 %v628, %v664
        %v667 = vmul.f32 %v666, %v666
        %669 = vst [vmem:[#allocation1] ss:$2 sm:$0xff] %v667
        %v670 = vld.sshfl [vmem:[#allocation1] sm:$0xff pattern:$0x75316420]
        %v671 = vld.sshfl [vmem:[#allocation1 + $0x8] sm:$0xff pattern:$0x75316420]
        %v674 = vsel %vm637, %v670, 0.0
        %v675 = vrot.slane %v674, 4
        %v676 = vadd.f32 %v674, %v675
        %v677 = vrot.slane %v676, 2
        %v678 = vadd.f32 %v676, %v677
        %v679 = vrot.slane %v678, 1
        %v680 = vadd.f32 %v678, %v679
        %v681 = vsel %vm637, %v671, 0.0
        %v682 = vrot.slane %v681, 4
        %v683 = vadd.f32 %v681, %v682
        %v684 = vrot.slane %v683, 2
        %v685 = vadd.f32 %v683, %v684
        %v686 = vrot.slane %v685, 1
        %v687 = vadd.f32 %v685, %v686
        %v688 = vmul.f32 %v680, %v658
        %v689 = vmul.f32 %v687, %v658
        %v690 = vadd.f32 %v688, 1e-06
        %v691 = vadd.f32 %v689, 1e-06
        %v692 = vrsqrt.pop %v690
        %v693 = vmul.f32 %v692, %v690
        %v694 = vmul.f32 %v693, %v692
        %v695 = vmul.f32 0.5, %v694
        %v696 = vsub.f32 1.5, %v695
        %v697 = vmul.f32 %v692, %v696
        %vm698 = vweird.f32 %v690
        %vm699 = vweird.f32 %v692
        %vm700 = vmor %vm698, %vm699
        %v701 = vsel %vm700, %v692, %v697
        %v702 = vrsqrt.pop %v691
        %v703 = vmul.f32 %v702, %v691
        %v704 = vmul.f32 %v703, %v702
        %v705 = vmul.f32 0.5, %v704
        %v706 = vsub.f32 1.5, %v705
        %v707 = vmul.f32 %v702, %v706
        %vm708 = vweird.f32 %v691
        %vm709 = vweird.f32 %v702
        %vm710 = vmor %vm708, %vm709
        %v711 = vsel %vm710, %v702, %v707
        %v714 = vrot.slane %v711, 4
        %v715 = vsel %vm637, %v701, %v714
        %v717 = vmul.f32 %v666, %v715
        %719 = vset.pattern.permute.xlu0 0
        %720 = vperm.xlu0 %719, %v629
        %v721 = vpop.permute.xlu0 %720
        %v723 = vunpack.c.l.s4 839922192
        %v724 = vunpack.c.0.s8 %v723
        %v725 = vperm.slane %v721, %v724
        %v727 = vmul.f32 %v717, %v725
        %729 = vset.pattern.permute.xlu0 0
        %730 = vperm.xlu0 %729, %v630
        %v731 = vpop.permute.xlu0 %730
        %v733 = vunpack.c.l.s4 839922192
        %v734 = vunpack.c.0.s8 %v733
        %v735 = vperm.slane %v731, %v734
        %v737 = vadd.f32 %v727, %v735
        %v738 = vld [vmem:[%s4] sm:$0xff]
        %v739 = vld [vmem:[%s5] sm:$0xff]
        %741 = vset.pattern.permute.xlu0 0
        %742 = vperm.xlu0 %741, %v739
        %v743 = vpop.permute.xlu0 %742
        %746 = vst [vmem:[#allocation1] ss:$2 sm:$0xff] %v737
        %v747 = vld.sshfl [vmem:[#allocation1] sm:$0xff pattern:$0x75316420]
        %v748 = vld.sshfl [vmem:[#allocation1 + $0x8] sm:$0xff pattern:$0x75316420]
        %vm749 = vcmask 31744
        %v751 = vsel %vm749, %v738, 0
        %v753 = vsel %vm637, %v747, 0
        %v755 = vsel %vm637, %v748, 0
        %757 = vmatpush.msra.mxu0 0.0
        %758 = vmatpush.msra.mxu0 0.0
        %759 = vmatpush.msra.mxu0 0.0
        %760 = vmatpush.msra.mxu0 0.0
        %761 = vmatpush.msra.mxu0 0.0
        %762 = vmatpush.msra.mxu0 0.0
        %763 = vmatpush.msra.mxu0 0.0
        %764 = vmatpush.msra.mxu0 0.0
        %765 = vmatpush.msra.mxu0 0.0
        %766 = vmatpush.msra.mxu0 0.0
        %767 = vmatpush.msra.mxu0 0.0
        %768 = vmatpush.msra.mxu0 0.0
        %769 = vmatpush.msra.mxu0 0.0
        %770 = vmatpush.msra.mxu0 0.0
        %771 = vmatpush.msra.mxu0 0.0
        %772 = vmatpush.msra.mxu0 %v753
        %773 = vmatmul.f32.gmra.mxu0 %v751
        %v774 = vpop.f32.mrf.mxu0
        %v775 = vadd.f32 %v743, %v774
        %776 = vdwg.mxu0
        %777 = vmatpush.msra.mxu0 0.0
        %778 = vmatpush.msra.mxu0 0.0
        %779 = vmatpush.msra.mxu0 0.0
        %780 = vmatpush.msra.mxu0 0.0
        %781 = vmatpush.msra.mxu0 0.0
        %782 = vmatpush.msra.mxu0 0.0
        %783 = vmatpush.msra.mxu0 0.0
        %784 = vmatpush.msra.mxu0 0.0
        %785 = vmatpush.msra.mxu0 0.0
        %786 = vmatpush.msra.mxu0 0.0
        %787 = vmatpush.msra.mxu0 0.0
        %788 = vmatpush.msra.mxu0 0.0
        %789 = vmatpush.msra.mxu0 0.0
        %790 = vmatpush.msra.mxu0 0.0
        %791 = vmatpush.msra.mxu0 0.0
        %792 = vmatpush.msra.mxu0 %v755
        %793 = vmatmul.f32.gmra.mxu0 %v751
        %v794 = vpop.f32.mrf.mxu0
        %v795 = vadd.f32 %v743, %v794
        %796 = vdwg.mxu0
        %v797 = vld [vmem:[%s6] sm:$0xff]
        %798 = vrot.lane.b32.xlu0 %v775, 17
        %v799 = vpop.permute.xlu0 %798
        %800 = vrot.lane.b32.xlu0 %v795, 17
        %v801 = vpop.permute.xlu0 %800
        %v802 = vlaneseq
        %v803 = vand.u32 %v802, 127
        %vm804 = vcmp.lt.s32.totalorder %v803, 17
        %v805 = vsel %vm804, %v799, %v801
        %v806 = vsel %vm804, %v801, %v799
        %v807 = vld [vmem:[%s1] ss:$8 sm:$0x3]
        %v809 = vperm.slane %v807, 0
        %v810 = vperm.slane %v807, 1
        %v813 = vmul.f32 %v806, %v809
        %v814 = vmul.f32 %v805, %v810
        %816 = vset.pattern.permute.xlu0 0
        %817 = vperm.xlu0 %816, %v797
        %v818 = vpop.permute.xlu0 %817
        %v820 = vmul.f32 %v813, %v818
        %v821 = vmul.f32 %v814, %v818
        %v822 = vadd.f32 %v820, 0.0
        %v823 = vadd.f32 %v821, 0.0
        %824 = vrot.lane.b32.xlu0 %v775, 16
        %v825 = vpop.permute.xlu0 %824
        %826 = vrot.lane.b32.xlu0 %v795, 16
        %v827 = vpop.permute.xlu0 %826
        %vm828 = vcmp.lt.s32.totalorder %v803, 16
        %v829 = vsel %vm828, %v825, %v827
        %v830 = vsel %vm828, %v827, %v825
        %s831 = scalar_lea.vmem %s1, 1
        %v832 = vld [vmem:[%s831] ss:$8 sm:$0x3]
        %v834 = vperm.slane %v832, 0
        %v835 = vperm.slane %v832, 1
        %v838 = vmul.f32 %v830, %v834
        %v839 = vmul.f32 %v829, %v835
        %840 = vset.pattern.permute.xlu0 1
        %841 = vperm.xlu0 %840, %v797
        %v842 = vpop.permute.xlu0 %841
        %v844 = vmul.f32 %v838, %v842
        %v845 = vmul.f32 %v839, %v842
        %v846 = vadd.f32 %v822, %v844
        %v847 = vadd.f32 %v823, %v845
        %848 = vrot.lane.b32.xlu0 %v775, 15
        %v849 = vpop.permute.xlu0 %848
        %850 = vrot.lane.b32.xlu0 %v795, 15
        %v851 = vpop.permute.xlu0 %850
        %vm852 = vcmp.lt.s32.totalorder %v803, 15
        %v853 = vsel %vm852, %v849, %v851
        %v854 = vsel %vm852, %v851, %v849
        %s855 = scalar_lea.vmem %s1, 2
        %v856 = vld [vmem:[%s855] ss:$8 sm:$0x3]
        %v858 = vperm.slane %v856, 0
        %v859 = vperm.slane %v856, 1
        %v862 = vmul.f32 %v854, %v858
        %v863 = vmul.f32 %v853, %v859
        %864 = vset.pattern.permute.xlu0 2
        %865 = vperm.xlu0 %864, %v797
        %v866 = vpop.permute.xlu0 %865
        %v868 = vmul.f32 %v862, %v866
        %v869 = vmul.f32 %v863, %v866
        %v870 = vadd.f32 %v846, %v868
        %v871 = vadd.f32 %v847, %v869
        %872 = vrot.lane.b32.xlu0 %v775, 1
        %v873 = vpop.permute.xlu0 %872
        %874 = vrot.lane.b32.xlu0 %v795, 1
        %v875 = vpop.permute.xlu0 %874
        %vm876 = vcmp.lt.s32.totalorder %v803, 1
        %v877 = vsel %vm876, %v873, %v875
        %v878 = vsel %vm876, %v875, %v873
        %s879 = scalar_lea.vmem %s1, 3
        %v880 = vld [vmem:[%s879] ss:$8 sm:$0x3]
        %v882 = vperm.slane %v880, 0
        %v883 = vperm.slane %v880, 1
        %v886 = vmul.f32 %v878, %v882
        %v887 = vmul.f32 %v877, %v883
        %888 = vset.pattern.permute.xlu0 3
        %889 = vperm.xlu0 %888, %v797
        %v890 = vpop.permute.xlu0 %889
        %v892 = vmul.f32 %v886, %v890
        %v893 = vmul.f32 %v887, %v890
        %v894 = vadd.f32 %v870, %v892
        %v895 = vadd.f32 %v871, %v893
        %896 = vset.pattern.permute.xlu0 4
        %897 = vperm.xlu0 %896, %v797
        %v898 = vpop.permute.xlu0 %897
        %v900 = vmul.f32 %v775, %v898
        %v901 = vmul.f32 %v795, %v898
        %v902 = vadd.f32 %v894, %v900
        %v903 = vadd.f32 %v895, %v901
        %904 = vrot.lane.b32.xlu0 %v775, 127
        %v905 = vpop.permute.xlu0 %904
        %906 = vrot.lane.b32.xlu0 %v795, 127
        %v907 = vpop.permute.xlu0 %906
        %vm908 = vcmp.lt.s32.totalorder %v803, 127
        %v909 = vsel %vm908, %v905, %v907
        %v910 = vsel %vm908, %v907, %v905
        %s911 = scalar_lea.vmem %s1, 5
        %v912 = vld [vmem:[%s911] ss:$8 sm:$0x3]
        %v914 = vperm.slane %v912, 0
        %v915 = vperm.slane %v912, 1
        %v918 = vmul.f32 %v909, %v914
        %v919 = vmul.f32 %v910, %v915
        %920 = vset.pattern.permute.xlu0 5
        %921 = vperm.xlu0 %920, %v797
        %v922 = vpop.permute.xlu0 %921
        %v924 = vmul.f32 %v918, %v922
        %v925 = vmul.f32 %v919, %v922
        %v926 = vadd.f32 %v902, %v924
        %v927 = vadd.f32 %v903, %v925
        %928 = vrot.lane.b32.xlu0 %v775, 113
        %v929 = vpop.permute.xlu0 %928
        %930 = vrot.lane.b32.xlu0 %v795, 113
        %v931 = vpop.permute.xlu0 %930
        %vm932 = vcmp.lt.s32.totalorder %v803, 113
        %v933 = vsel %vm932, %v929, %v931
        %v934 = vsel %vm932, %v931, %v929
        %s935 = scalar_lea.vmem %s1, 6
        %v936 = vld [vmem:[%s935] ss:$8 sm:$0x3]
        %v938 = vperm.slane %v936, 0
        %v939 = vperm.slane %v936, 1
        %v942 = vmul.f32 %v933, %v938
        %v943 = vmul.f32 %v934, %v939
        %944 = vset.pattern.permute.xlu0 6
        %945 = vperm.xlu0 %944, %v797
        %v946 = vpop.permute.xlu0 %945
        %v948 = vmul.f32 %v942, %v946
        %v949 = vmul.f32 %v943, %v946
        %v950 = vadd.f32 %v926, %v948
        %v951 = vadd.f32 %v927, %v949
        %952 = vrot.lane.b32.xlu0 %v775, 112
        %v953 = vpop.permute.xlu0 %952
        %954 = vrot.lane.b32.xlu0 %v795, 112
        %v955 = vpop.permute.xlu0 %954
        %vm956 = vcmp.lt.s32.totalorder %v803, 112
        %v957 = vsel %vm956, %v953, %v955
        %v958 = vsel %vm956, %v955, %v953
        %s959 = scalar_lea.vmem %s1, 7
        %v960 = vld [vmem:[%s959] ss:$8 sm:$0x3]
        %v962 = vperm.slane %v960, 0
        %v963 = vperm.slane %v960, 1
        %v966 = vmul.f32 %v957, %v962
        %v967 = vmul.f32 %v958, %v963
        %968 = vset.pattern.permute.xlu0 7
        %969 = vperm.xlu0 %968, %v797
        %v970 = vpop.permute.xlu0 %969
        %v972 = vmul.f32 %v966, %v970
        %v973 = vmul.f32 %v967, %v970
        %v974 = vadd.f32 %v950, %v972
        %v975 = vadd.f32 %v951, %v973
        %976 = vrot.lane.b32.xlu0 %v775, 111
        %v977 = vpop.permute.xlu0 %976
        %978 = vrot.lane.b32.xlu0 %v795, 111
        %v979 = vpop.permute.xlu0 %978
        %vm980 = vcmp.lt.s32.totalorder %v803, 111
        %v981 = vsel %vm980, %v977, %v979
        %v982 = vsel %vm980, %v979, %v977
        %s983 = scalar_lea.vmem %s1, 16
        %v984 = vld [vmem:[%s983] ss:$8 sm:$0x3]
        %v986 = vperm.slane %v984, 0
        %v987 = vperm.slane %v984, 1
        %v990 = vmul.f32 %v981, %v986
        %v991 = vmul.f32 %v982, %v987
        %992 = vset.pattern.permute.xlu0 8
        %993 = vperm.xlu0 %992, %v797
        %v994 = vpop.permute.xlu0 %993
        %v996 = vmul.f32 %v990, %v994
        %v997 = vmul.f32 %v991, %v994
        %v998 = vadd.f32 %v974, %v996
        %v999 = vadd.f32 %v975, %v997
        %v1000 = vld [vmem:[%s7] sm:$0xff]
        %1002 = vset.pattern.permute.xlu0 0
        %1003 = vperm.xlu0 %1002, %v1000
        %v1004 = vpop.permute.xlu0 %1003
        %v1006 = vadd.f32 %v998, %v1004
        %v1007 = vadd.f32 %v999, %v1004
        %v1010 = vrot.slane %v1006, 4
        %v1011 = vrot.slane %v1007, 4
        %v1014 = vmul.f32 %v1006, %v1010
        %v1015 = vmul.f32 %v1007, %v1011
        %v1016 = vld [vmem:[%s8] sm:$0xf]
        %v1018 = vsel %vm749, %v1016, 0
        %v1021 = vsel %vm637, %v1014, 0
        %v1024 = vsel %vm637, %v1015, 0
        %1026 = vmatpush.msra.mxu0 0.0
        %1027 = vmatpush.msra.mxu0 0.0
        %1028 = vmatpush.msra.mxu0 0.0
        %1029 = vmatpush.msra.mxu0 0.0
        %1030 = vmatpush.msra.mxu0 0.0
        %1031 = vmatpush.msra.mxu0 0.0
        %1032 = vmatpush.msra.mxu0 0.0
        %1033 = vmatpush.msra.mxu0 0.0
        %1034 = vmatpush.msra.mxu0 0.0
        %1035 = vmatpush.msra.mxu0 0.0
        %1036 = vmatpush.msra.mxu0 0.0
        %1037 = vmatpush.msra.mxu0 0.0
        %1038 = vmatpush.msra.mxu0 0.0
        %1039 = vmatpush.msra.mxu0 0.0
        %1040 = vmatpush.msra.mxu0 0.0
        %1041 = vmatpush.msra.mxu0 %v1021
        %1042 = vmatmul.f32.gmra.mxu0 %v1018
        %v1043 = vpop.f32.mrf.mxu0
        %v1044 = vadd.f32 0.0, %v1043
        %1045 = vdwg.mxu0
        %1046 = vmatpush.msra.mxu0 0.0
        %1047 = vmatpush.msra.mxu0 0.0
        %1048 = vmatpush.msra.mxu0 0.0
        %1049 = vmatpush.msra.mxu0 0.0
        %1050 = vmatpush.msra.mxu0 0.0
        %1051 = vmatpush.msra.mxu0 0.0
        %1052 = vmatpush.msra.mxu0 0.0
        %1053 = vmatpush.msra.mxu0 0.0
        %1054 = vmatpush.msra.mxu0 0.0
        %1055 = vmatpush.msra.mxu0 0.0
        %1056 = vmatpush.msra.mxu0 0.0
        %1057 = vmatpush.msra.mxu0 0.0
        %1058 = vmatpush.msra.mxu0 0.0
        %1059 = vmatpush.msra.mxu0 0.0
        %1060 = vmatpush.msra.mxu0 0.0
        %1061 = vmatpush.msra.mxu0 %v1024
        %1062 = vmatmul.f32.gmra.mxu0 %v1018
        %v1063 = vpop.f32.mrf.mxu0
        %v1064 = vadd.f32 0.0, %v1063
        %1065 = vdwg.mxu0
        %v1066 = vsel %vm637, %v1044, 0.0
        %v1067 = vsel %vm637, %v1064, 0.0
        %v1068 = vadd.f32 %v1066, %v1067
        %1069 = vadd.xlane.f32.xlu0 %v1068
        %v1070 = vpop.xlane.xlu0 %1069
        %v1071 = vrcp.pop 256.0
        %v1072 = vmul.f32 256.0, %v1071
        %v1073 = vsub.f32 1.0, %v1072
        %v1074 = vmul.f32 %v1071, %v1073
        %v1075 = vadd.f32 %v1071, %v1074
        %vm1076 = vweird.f32 %v1071
        %v1077 = vsel %vm1076, %v1071, %v1075
        %v1078 = vmul.f32 %v1070, %v1077
        %v1079 = vld [vmem:[%s9] sm:$0xf]
        %v1080 = vadd.f32 %v1078, %v1079
        %1082 = vset.pattern.permute.xlu0 0
        %1083 = vperm.xlu0 %1082, %v1080
        %v1084 = vpop.permute.xlu0 %1083
        %v1086 = vmul.f32 %v1014, %v1084
        %v1087 = vmul.f32 %v1015, %v1084
        %v1088 = vld [vmem:[%s10] sm:$0xf]
        %v1089 = vld [vmem:[%s11] sm:$0xf]
        %1091 = vset.pattern.permute.xlu0 0
        %1092 = vperm.xlu0 %1091, %v1089
        %v1093 = vpop.permute.xlu0 %1092
        %v1096 = vsel %vm749, %v1088, 0
        %v1099 = vsel %vm637, %v1086, 0
        %v1102 = vsel %vm637, %v1087, 0
        %1104 = vmatpush.msra.mxu0 0.0
        %1105 = vmatpush.msra.mxu0 0.0
        %1106 = vmatpush.msra.mxu0 0.0
        %1107 = vmatpush.msra.mxu0 0.0
        %1108 = vmatpush.msra.mxu0 0.0
        %1109 = vmatpush.msra.mxu0 0.0
        %1110 = vmatpush.msra.mxu0 0.0
        %1111 = vmatpush.msra.mxu0 0.0
        %1112 = vmatpush.msra.mxu0 0.0
        %1113 = vmatpush.msra.mxu0 0.0
        %1114 = vmatpush.msra.mxu0 0.0
        %1115 = vmatpush.msra.mxu0 0.0
        %1116 = vmatpush.msra.mxu0 0.0
        %1117 = vmatpush.msra.mxu0 0.0
        %1118 = vmatpush.msra.mxu0 0.0
        %1119 = vmatpush.msra.mxu0 %v1099
        %1120 = vmatmul.f32.gmra.mxu0 %v1096
        %v1121 = vpop.f32.mrf.mxu0
        %v1122 = vadd.f32 %v1093, %v1121
        %1123 = vdwg.mxu0
        %1124 = vmatpush.msra.mxu0 0.0
        %1125 = vmatpush.msra.mxu0 0.0
        %1126 = vmatpush.msra.mxu0 0.0
        %1127 = vmatpush.msra.mxu0 0.0
        %1128 = vmatpush.msra.mxu0 0.0
        %1129 = vmatpush.msra.mxu0 0.0
        %1130 = vmatpush.msra.mxu0 0.0
        %1131 = vmatpush.msra.mxu0 0.0
        %1132 = vmatpush.msra.mxu0 0.0
        %1133 = vmatpush.msra.mxu0 0.0
        %1134 = vmatpush.msra.mxu0 0.0
        %1135 = vmatpush.msra.mxu0 0.0
        %1136 = vmatpush.msra.mxu0 0.0
        %1137 = vmatpush.msra.mxu0 0.0
        %1138 = vmatpush.msra.mxu0 0.0
        %1139 = vmatpush.msra.mxu0 %v1102
        %1140 = vmatmul.f32.gmra.mxu0 %v1096
        %v1141 = vpop.f32.mrf.mxu0
        %v1142 = vadd.f32 %v1093, %v1141
        %1143 = vdwg.mxu0
        %v1144 = vld [vmem:[%s12] sm:$0xf]
        %1146 = vset.pattern.permute.xlu0 0
        %1147 = vperm.xlu0 %1146, %v1144
        %v1148 = vpop.permute.xlu0 %1147
        %v1150 = vmul.f32 %v1122, %v1148
        %v1151 = vmul.f32 %v1142, %v1148
        %v1154 = vrot.slane %v1151, 4
        %v1155 = vsel %vm637, %v1150, %v1154
        %v1157 = vadd.f32 %v628, %v1155
        %v1158 = vld [vmem:[%s13] sm:$0xf]
        %v1159 = vld [vmem:[%s14] sm:$0xf]
        %1161 = vst [vmem:[#allocation1] ss:$2 sm:$0xff] %v1157
        %v1162 = vld.sshfl [vmem:[#allocation1] sm:$0xff pattern:$0x75316420]
        %v1163 = vld.sshfl [vmem:[#allocation1 + $0x8] sm:$0xff pattern:$0x75316420]
        %v1166 = vsel %vm637, %v1162, 0.0
        %v1167 = vrot.slane %v1166, 4
        %v1168 = vadd.f32 %v1166, %v1167
        %v1169 = vrot.slane %v1168, 2
        %v1170 = vadd.f32 %v1168, %v1169
        %v1171 = vrot.slane %v1170, 1
        %v1172 = vadd.f32 %v1170, %v1171
        %v1173 = vsel %vm637, %v1163, 0.0
        %v1174 = vrot.slane %v1173, 4
        %v1175 = vadd.f32 %v1173, %v1174
        %v1176 = vrot.slane %v1175, 2
        %v1177 = vadd.f32 %v1175, %v1176
        %v1178 = vrot.slane %v1177, 1
        %v1179 = vadd.f32 %v1177, %v1178
        %v1180 = vmul.f32 %v1172, %v658
        %v1181 = vmul.f32 %v1179, %v658
        %v1184 = vrot.slane %v1181, 4
        %v1185 = vsel %vm637, %v1180, %v1184
        %v1187 = vsub.f32 %v1157, %v1185
        %v1188 = vmul.f32 %v1187, %v1187
        %1190 = vst [vmem:[#allocation1] ss:$2 sm:$0xff] %v1188
        %v1191 = vld.sshfl [vmem:[#allocation1] sm:$0xff pattern:$0x75316420]
        %v1192 = vld.sshfl [vmem:[#allocation1 + $0x8] sm:$0xff pattern:$0x75316420]
        %v1195 = vsel %vm637, %v1191, 0.0
        %v1196 = vrot.slane %v1195, 4
        %v1197 = vadd.f32 %v1195, %v1196
        %v1198 = vrot.slane %v1197, 2
        %v1199 = vadd.f32 %v1197, %v1198
        %v1200 = vrot.slane %v1199, 1
        %v1201 = vadd.f32 %v1199, %v1200
        %v1202 = vsel %vm637, %v1192, 0.0
        %v1203 = vrot.slane %v1202, 4
        %v1204 = vadd.f32 %v1202, %v1203
        %v1205 = vrot.slane %v1204, 2
        %v1206 = vadd.f32 %v1204, %v1205
        %v1207 = vrot.slane %v1206, 1
        %v1208 = vadd.f32 %v1206, %v1207
        %v1209 = vmul.f32 %v1201, %v658
        %v1210 = vmul.f32 %v1208, %v658
        %v1211 = vadd.f32 %v1209, 1e-06
        %v1212 = vadd.f32 %v1210, 1e-06
        %v1213 = vrsqrt.pop %v1211
        %v1214 = vmul.f32 %v1213, %v1211
        %v1215 = vmul.f32 %v1214, %v1213
        %v1216 = vmul.f32 0.5, %v1215
        %v1217 = vsub.f32 1.5, %v1216
        %v1218 = vmul.f32 %v1213, %v1217
        %vm1219 = vweird.f32 %v1211
        %vm1220 = vweird.f32 %v1213
        %vm1221 = vmor %vm1219, %vm1220
        %v1222 = vsel %vm1221, %v1213, %v1218
        %v1223 = vrsqrt.pop %v1212
        %v1224 = vmul.f32 %v1223, %v1212
        %v1225 = vmul.f32 %v1224, %v1223
        %v1226 = vmul.f32 0.5, %v1225
        %v1227 = vsub.f32 1.5, %v1226
        %v1228 = vmul.f32 %v1223, %v1227
        %vm1229 = vweird.f32 %v1212
        %vm1230 = vweird.f32 %v1223
        %vm1231 = vmor %vm1229, %vm1230
        %v1232 = vsel %vm1231, %v1223, %v1228
        %v1235 = vrot.slane %v1232, 4
        %v1236 = vsel %vm637, %v1222, %v1235
        %v1238 = vmul.f32 %v1187, %v1236
        %1240 = vset.pattern.permute.xlu0 0
        %1241 = vperm.xlu0 %1240, %v1158
        %v1242 = vpop.permute.xlu0 %1241
        %v1244 = vunpack.c.l.s4 839922192
        %v1245 = vunpack.c.0.s8 %v1244
        %v1246 = vperm.slane %v1242, %v1245
        %v1248 = vmul.f32 %v1238, %v1246
        %1250 = vset.pattern.permute.xlu0 0
        %1251 = vperm.xlu0 %1250, %v1159
        %v1252 = vpop.permute.xlu0 %1251
        %v1254 = vunpack.c.l.s4 839922192
        %v1255 = vunpack.c.0.s8 %v1254
        %v1256 = vperm.slane %v1252, %v1255
        %v1258 = vadd.f32 %v1248, %v1256
        %v1259 = vld [vmem:[%s15] sm:$0xff]
        %v1260 = vld [vmem:[%s16] sm:$0xff]
        %1262 = vset.pattern.permute.xlu0 0
        %1263 = vperm.xlu0 %1262, %v1260
        %v1264 = vpop.permute.xlu0 %1263
        %1267 = vst [vmem:[#allocation1] ss:$2 sm:$0xff] %v1258
        %v1268 = vld.sshfl [vmem:[#allocation1] sm:$0xff pattern:$0x75316420]
        %v1269 = vld.sshfl [vmem:[#allocation1 + $0x8] sm:$0xff pattern:$0x75316420]
        %v1271 = vsel %vm749, %v1259, 0
        %v1273 = vsel %vm637, %v1268, 0
        %v1275 = vsel %vm637, %v1269, 0
        %1277 = vmatpush.msra.mxu0 0.0
        %1278 = vmatpush.msra.mxu0 0.0
        %1279 = vmatpush.msra.mxu0 0.0
        %1280 = vmatpush.msra.mxu0 0.0
        %1281 = vmatpush.msra.mxu0 0.0
        %1282 = vmatpush.msra.mxu0 0.0
        %1283 = vmatpush.msra.mxu0 0.0
        %1284 = vmatpush.msra.mxu0 0.0
        %1285 = vmatpush.msra.mxu0 0.0
        %1286 = vmatpush.msra.mxu0 0.0
        %1287 = vmatpush.msra.mxu0 0.0
        %1288 = vmatpush.msra.mxu0 0.0
        %1289 = vmatpush.msra.mxu0 0.0
        %1290 = vmatpush.msra.mxu0 0.0
        %1291 = vmatpush.msra.mxu0 0.0
        %1292 = vmatpush.msra.mxu0 %v1273
        %1293 = vmatmul.f32.gmra.mxu0 %v1271
        %v1294 = vpop.f32.mrf.mxu0
        %v1295 = vadd.f32 %v1264, %v1294
        %1296 = vdwg.mxu0
        %1297 = vmatpush.msra.mxu0 0.0
        %1298 = vmatpush.msra.mxu0 0.0
        %1299 = vmatpush.msra.mxu0 0.0
        %1300 = vmatpush.msra.mxu0 0.0
        %1301 = vmatpush.msra.mxu0 0.0
        %1302 = vmatpush.msra.mxu0 0.0
        %1303 = vmatpush.msra.mxu0 0.0
        %1304 = vmatpush.msra.mxu0 0.0
        %1305 = vmatpush.msra.mxu0 0.0
        %1306 = vmatpush.msra.mxu0 0.0
        %1307 = vmatpush.msra.mxu0 0.0
        %1308 = vmatpush.msra.mxu0 0.0
        %1309 = vmatpush.msra.mxu0 0.0
        %1310 = vmatpush.msra.mxu0 0.0
        %1311 = vmatpush.msra.mxu0 0.0
        %1312 = vmatpush.msra.mxu0 %v1275
        %1313 = vmatmul.f32.gmra.mxu0 %v1271
        %v1314 = vpop.f32.mrf.mxu0
        %v1315 = vadd.f32 %v1264, %v1314
        %1316 = vdwg.mxu0
        %v1319 = vrot.slane %v1295, 4
        %v1320 = vrot.slane %v1315, 4
        %v1323 = vmul.f32 %v1295, %v1319
        %v1324 = vmul.f32 %v1315, %v1320
        %v1325 = vld [vmem:[%s17] sm:$0xf]
        %v1326 = vld [vmem:[%s18] sm:$0xf]
        %1328 = vset.pattern.permute.xlu0 0
        %1329 = vperm.xlu0 %1328, %v1326
        %v1330 = vpop.permute.xlu0 %1329
        %v1333 = vsel %vm749, %v1325, 0
        %v1336 = vsel %vm637, %v1323, 0
        %v1339 = vsel %vm637, %v1324, 0
        %1341 = vmatpush.msra.mxu0 0.0
        %1342 = vmatpush.msra.mxu0 0.0
        %1343 = vmatpush.msra.mxu0 0.0
        %1344 = vmatpush.msra.mxu0 0.0
        %1345 = vmatpush.msra.mxu0 0.0
        %1346 = vmatpush.msra.mxu0 0.0
        %1347 = vmatpush.msra.mxu0 0.0
        %1348 = vmatpush.msra.mxu0 0.0
        %1349 = vmatpush.msra.mxu0 0.0
        %1350 = vmatpush.msra.mxu0 0.0
        %1351 = vmatpush.msra.mxu0 0.0
        %1352 = vmatpush.msra.mxu0 0.0
        %1353 = vmatpush.msra.mxu0 0.0
        %1354 = vmatpush.msra.mxu0 0.0
        %1355 = vmatpush.msra.mxu0 0.0
        %1356 = vmatpush.msra.mxu0 %v1336
        %1357 = vmatmul.f32.gmra.mxu0 %v1333
        %v1358 = vpop.f32.mrf.mxu0
        %v1359 = vadd.f32 %v1330, %v1358
        %1360 = vdwg.mxu0
        %1361 = vmatpush.msra.mxu0 0.0
        %1362 = vmatpush.msra.mxu0 0.0
        %1363 = vmatpush.msra.mxu0 0.0
        %1364 = vmatpush.msra.mxu0 0.0
        %1365 = vmatpush.msra.mxu0 0.0
        %1366 = vmatpush.msra.mxu0 0.0
        %1367 = vmatpush.msra.mxu0 0.0
        %1368 = vmatpush.msra.mxu0 0.0
        %1369 = vmatpush.msra.mxu0 0.0
        %1370 = vmatpush.msra.mxu0 0.0
        %1371 = vmatpush.msra.mxu0 0.0
        %1372 = vmatpush.msra.mxu0 0.0
        %1373 = vmatpush.msra.mxu0 0.0
        %1374 = vmatpush.msra.mxu0 0.0
        %1375 = vmatpush.msra.mxu0 0.0
        %1376 = vmatpush.msra.mxu0 %v1339
        %1377 = vmatmul.f32.gmra.mxu0 %v1333
        %v1378 = vpop.f32.mrf.mxu0
        %v1379 = vadd.f32 %v1330, %v1378
        %1380 = vdwg.mxu0
        %v1381 = vld [vmem:[%s19] sm:$0xf]
        %1383 = vset.pattern.permute.xlu0 0
        %1384 = vperm.xlu0 %1383, %v1381
        %v1385 = vpop.permute.xlu0 %1384
        %v1387 = vmul.f32 %v1359, %v1385
        %v1388 = vmul.f32 %v1379, %v1385
        %v1391 = vrot.slane %v1388, 4
        %v1392 = vsel %vm637, %v1387, %v1391
        %v1394 = vadd.f32 %v1157, %v1392
        %1395 = vst [vmem:[%s622] sm:$0xff] %v1394
        %s1396 = sand.u32 %s467, 1
        %s1397 = scalar_lea.sflag [#allocation3], %s1396
        %s1398 = sand.u32 %s467, 1
        %s1399 = smul.addr %s1398, 8
        %s1400 = scalar_lea.vmem [#allocation2], %s1399
        // Predicated region
        $region101: #{tpu_custom_call.1} parent=99 // pred_check
          %p1401 = pneg %p477
        $region102: #{tpu_custom_call.1} parent=99 // pred_check_branch
          %1403 = sbr.rel (%p1401) target = $region104
        $region103: #{tpu_custom_call.1} parent=99 // pred_region
          %1405 = vsyncadd %s1397, 0
          %s1406 = smul.addr %s34, 2
          %s1407 = smul.addr %s1406, 4
          %s1408 = scalar_lea.hbm %s20, %s1407
          %s1410 = sshll.u32 %s1400, 4
          %s1411 = int_to_ptr.vmem [resolvable:$true] %s1410
          %s1412 = sshll.u32 %s1408, 4
          %s1413 = int_to_ptr.hbm [resolvable:$true] %s1412
          %1415 = dma.vmem_to_hbm [thread:$0]  %s1411, 128, %s1413, %s1397
        $region104: #{tpu_custom_call.1} parent=99 // pred_fallthru
          _
      $region100: #{tpu_custom_call.1} parent=5 // pred_fallthru
        _
      %p1416 = scmp.le.s32.totalorder 2, %s29
      // Predicated region
      $region105: #{tpu_custom_call.1} parent=5 // pred_check
        %p1417 = pneg %p1416
      $region106: #{tpu_custom_call.1} parent=5 // pred_check_branch
        %1419 = sbr.rel (%p1417) target = $region108
      $region107: #{tpu_custom_call.1} parent=5 // pred_region
        %s1420 = ssub.s32 %s29, 2
        // Predicated region
        $region109: #{tpu_custom_call.1} parent=107 // pred_check
          %p1421 = pneg %p483
        $region110: #{tpu_custom_call.1} parent=107 // pred_check_branch
          %1423 = sbr.rel (%p1421) target = $region112
        $region111: #{tpu_custom_call.1} parent=107 // pred_region
          %s1424 = sand.u32 %s468, 1
          %s1425 = scalar_lea.sflag [#allocation3], %s1424
          %s1426 = sand.u32 %s468, 1
          %s1427 = smul.addr %s1426, 8
          %s1428 = scalar_lea.vmem [#allocation2], %s1427
          %1430 = dma.done %s1425, 128
        $region112: #{tpu_custom_call.1} parent=107 // pred_fallthru
          _
      $region108: #{tpu_custom_call.1} parent=5 // pred_fallthru
        _
    $region6: #{tpu_custom_call.1} parent=1 // loop_footer
      %s33 = sadd.s32 1, %s29
    $region7: #{tpu_custom_call.1} parent=1 // loop_footer_branch
      %28 = sbr.rel target = $region3
    $region8: #{tpu_custom_call.1} parent=1 // loop_exit
      _
    %1431 = vsyncpa [#allocation3], 1
    %s1432 = scalar_lea.sflag [#allocation3], 1
    %1433 = vsyncpa %s1432, 1

</llo_original>
